<compile_context>
chip_gen: v5e
topology: v5e:2x2
jax: 0.10.0
libtpu: 0.0.40
codegen_flags: <defaults>
</compile_context>

<pallas_src>
import functools

import jax
import jax.numpy as jnp
from jax.experimental import pallas as pl
from jax.experimental.pallas import tpu as pltpu


def _round_up(x, m):
    return (x + m - 1) // m * m


def _vmem_limit_bytes(*block_bytes):
    # Double-buffered blocks + generous slack, capped for v7x's 64 MiB VMEM.
    need = 2 * sum(int(b) for b in block_bytes)
    return int(min(max(4 * need, 16 * 1024 * 1024), 48 * 1024 * 1024))


def _pick_row_tile(N, Ho, Wo, Cp):
    """Output-row tile Th for kernel 1: a divisor of Ho with (Th*Wo) sublane
    aligned and a ~<=2 MiB f32 accumulator block; biased toward >=4 total grid
    steps so the pipeline / megacore has parallel tiles even for small N."""
    ok = [d for d in range(1, Ho + 1)
          if Ho % d == 0 and ((d * Wo) % 8 == 0 or d == Ho)]
    if not ok:
        return Ho
    budget = 2 * 1024 * 1024
    fits = [d for d in ok if d * Wo * Cp * 4 <= budget] or [min(ok)]
    th = max(fits)
    if N * (Ho // th) < 4:
        smaller = [d for d in fits if N * (Ho // d) >= 4]
        if smaller:
            th = max(smaller)
    return th


def _pick_col_tile(HoWo, cap=4096):
    """Row tile for the BN+ReLU pass: a multiple-of-128 divisor of Ho*Wo so the
    transposed (Cout, TM) store stays lane-dense; as large as ~cap rows."""
    if HoWo % 128 != 0:
        return HoWo   # TODO(synk): pad Ho*Wo to a 128 multiple for huge odd sizes
    best, d = 128, 128
    while d <= min(HoWo, cap):
        if HoWo % d == 0:
            best = d
        d += 128
    return best


def _make_conv_stats_kernel(KH, KW, stride, Th, Wo, Cin, Cp):
    Wh = (Th - 1) * stride + KH      # input rows needed per output-row tile
    Ww = (Wo - 1) * stride + 1       # input cols needed per tap (pre-stride)

    def kernel(x_ref, w_ref, y_ref, stats_ref):
        # x_ref    : (Hp, Wp*Cin)    bf16  one padded image, W/C merged (lane-dense)
        # w_ref    : (KH*KW*Cin, Cp) bf16  zero-padded output channels
        # y_ref    : (Th*Wo, Cp)     bf16  conv output tile
        # stats_ref: (2, Cp)         f32   [block sum ; block centered sum-sq]
        t = pl.program_id(1)
        row0 = t * (Th * stride)
        if (Th * stride) % 8 == 0:
            row0 = pl.multiple_of(row0, 8)
        xw = x_ref[pl.ds(row0, Wh), :]                        # (Wh, Wp*Cin)

        # In-VMEM im2col: one (Th*Wo, KH*KW*Cin) slab -> single MXU dot
        # (K = KH*KW*Cin instead of KH*KW pushes with K = Cin).
        pieces = []
        for kh in range(KH):
            rows = xw[kh:kh + (Th - 1) * stride + 1:stride, :]   # (Th, Wp*Cin)
            for kw in range(KW):
                cols = rows[:, kw * Cin:(kw + Ww) * Cin]          # (Th, Ww*Cin)
                cols = cols.reshape(Th, Ww, Cin)
                if stride > 1:
                    cols = cols[:, ::stride, :]
                pieces.append(cols)                               # (Th, Wo, Cin)
        slab = jnp.concatenate(pieces, axis=-1)                   # (Th, Wo, K)
        slab = slab.reshape(Th * Wo, KH * KW * Cin)

        # Local f32 accumulator: written to VMEM exactly once (no RMW).
        acc = jnp.dot(slab, w_ref[...], preferred_element_type=jnp.float32)
        y_ref[...] = acc.astype(jnp.bfloat16)

        # Per-block mean-centered partial stats; combined with Chan's parallel
        # variance formula in the wrapper (avoids E[x^2]-E[x]^2 cancellation).
        s = jnp.sum(acc, axis=0, keepdims=True)                   # (1, Cp)
        mu = s * (1.0 / (Th * Wo))
        d = acc - mu
        ss = jnp.sum(d * d, axis=0, keepdims=True)                # (1, Cp)
        stats_ref[...] = jnp.concatenate([s, ss], axis=0)

    return kernel


def _make_bn_relu_nchw_kernel(Cout):
    def kernel(y_ref, scale_ref, shift_ref, o_ref):
        # y_ref: (TM, Cp) bf16 ; scale/shift: (1, Cp) f32 ; o_ref: (Cout, TM) f32
        y = y_ref[...].astype(jnp.float32)
        z = jnp.maximum(y * scale_ref[...] + shift_ref[...], 0.0)
        o_ref[...] = z.T[:Cout, :]      # well-shaped XLU transpose, lane-dense store
    return kernel


@functools.partial(jax.jit, static_argnames=("stride", "padding", "eps"))
def basic_conv2d(x_nchw, weight, bias, gamma, beta, *,
                 stride=1, padding=0, eps=1e-5):
    # `bias` is accepted for nn.Conv2d API parity but never computed: a constant
    # per-channel bias is exactly cancelled by training-mode BatchNorm.
    # TODO(synk): reinstate the bias if eval-mode (running-stats) BN is needed.
    del bias

    N, Cin, H, W = x_nchw.shape
    Cout, Cin_w, KH, KW = weight.shape
    assert Cin == Cin_w
    Ho = (H + 2 * padding - KH) // stride + 1
    Wo = (W + 2 * padding - KW) // stride + 1
    Hp, Wp = H + 2 * padding, W + 2 * padding
    Cp = _round_up(Cout, 128)          # lane-dense channel dimension
    M = N * Ho * Wo
    K = KH * KW * Cin

    Th = _pick_row_tile(N, Ho, Wo, Cp)
    nT = Ho // Th

    # --- layout glue only (no HBM im2col): NCHW -> (N, Hp, Wp*Cin) bf16 ---
    x_nhwc = jnp.transpose(x_nchw, (0, 2, 3, 1)).astype(jnp.bfloat16)
    x_pad = jnp.pad(x_nhwc, ((0, 0), (padding, padding),
                             (padding, padding), (0, 0)))
    x_pad = x_pad.reshape(N, Hp, Wp * Cin)          # dense minor dim for DMA/VMEM

    # (Cout, Cin, KH, KW) -> (KH*KW*Cin, Cp) bf16, zero-padded output channels
    w = jnp.transpose(weight, (2, 3, 1, 0)).reshape(K, Cout)
    w = jnp.pad(w, ((0, 0), (0, Cp - Cout))).astype(jnp.bfloat16)

    # --- kernel 1: conv (single K=KH*KW*Cin MXU dot) + partial BN stats ---
    conv_kernel = _make_conv_stats_kernel(KH, KW, stride, Th, Wo, Cin, Cp)
    vmem1 = _vmem_limit_bytes(
        Hp * _round_up(Wp * Cin, 128) * 2,   # input block (lane-padded, bf16)
        K * Cp * 2,                          # weights
        Th * Wo * Cp * 2,                    # y tile (bf16)
        Th * Wo * Cp * 4,                    # f32 accumulator / slab temporaries
        2 * Cp * 4)
    conv_y, stats = pl.pallas_call(
        conv_kernel,
        out_shape=(
            jax.ShapeDtypeStruct((N, Ho * Wo, Cp), jnp.bfloat16),
            jax.ShapeDtypeStruct((N, nT, 2, Cp), jnp.float32),
        ),
        grid=(N, nT),
        in_specs=[
            pl.BlockSpec((None, Hp, Wp * Cin), lambda n, t: (n, 0, 0)),
            pl.BlockSpec((K, Cp), lambda n, t: (0, 0)),
        ],
        out_specs=(
            pl.BlockSpec((None, Th * Wo, Cp), lambda n, t: (n, t, 0)),
            pl.BlockSpec((None, None, 2, Cp), lambda n, t: (n, t, 0, 0)),
        ),
        compiler_params=pltpu.CompilerParams(
            dimension_semantics=("parallel", "parallel"),
            vmem_limit_bytes=vmem1),
    )(x_pad, w)

    # --- tiny per-channel glue: fold training-mode BN into scale/shift ---
    cnt = Th * Wo
    bsum = stats[:, :, 0, :].reshape(-1, Cp)         # per-block sums
    bss = stats[:, :, 1, :].reshape(-1, Cp)          # per-block centered sum-sq
    mean = jnp.sum(bsum, axis=0) / M
    bmean = bsum / cnt
    m2 = jnp.sum(bss, axis=0) + cnt * jnp.sum((bmean - mean) ** 2, axis=0)
    var = jnp.maximum(m2 / M, 0.0)                   # biased (training) variance
    gamma_p = jnp.zeros((Cp,), jnp.float32).at[:Cout].set(gamma.astype(jnp.float32))
    beta_p = jnp.zeros((Cp,), jnp.float32).at[:Cout].set(beta.astype(jnp.float32))
    scale = (gamma_p * jax.lax.rsqrt(var + eps)).reshape(1, Cp)
    shift = (beta_p - mean * scale[0]).reshape(1, Cp)

    # --- kernel 2: BN + ReLU + fold to channel-major (NCHW) layout ---
    TM = _pick_col_tile(Ho * Wo)
    nJ = (Ho * Wo) // TM
    bn_kernel = _make_bn_relu_nchw_kernel(Cout)
    vmem2 = _vmem_limit_bytes(TM * Cp * 2, 2 * Cp * 4,
                              TM * Cp * 4, Cout * TM * 4)
    out = pl.pallas_call(
        bn_kernel,
        out_shape=jax.ShapeDtypeStruct((N, Cout, Ho * Wo), jnp.float32),
        grid=(N, nJ),
        in_specs=[
            pl.BlockSpec((None, TM, Cp), lambda n, j: (n, j, 0)),
            pl.BlockSpec((1, Cp), lambda n, j: (0, 0)),
            pl.BlockSpec((1, Cp), lambda n, j: (0, 0)),
        ],
        out_specs=pl.BlockSpec((None, Cout, TM), lambda n, j: (n, 0, j)),
        compiler_params=pltpu.CompilerParams(
            dimension_semantics=("parallel", "parallel"),
            vmem_limit_bytes=vmem2),
    )(conv_y, scale, shift)

    # Free metadata reshape to NCHW: no transpose / channel-slice HBM pass.
    return out.reshape(N, Cout, Ho, Wo)


if __name__ == "__main__":
    key = jax.random.PRNGKey(0)
    k1, k2, k3, k4, k5 = jax.random.split(key, 5)

    # BasicConv2d(in_channels=4, out_channels=8, kernel_size=3, padding=1)
    N, Cin, H, W = 2, 4, 16, 16
    Cout, KH, KW = 8, 3, 3
    stride, padding = 1, 1

    x = jax.random.normal(k1, (N, Cin, H, W), jnp.float32)
    weight = 0.1 * jax.random.normal(k2, (Cout, Cin, KH, KW), jnp.float32)
    bias = 0.1 * jax.random.normal(k3, (Cout,), jnp.float32)
    gamma = 1.0 + 0.1 * jax.random.normal(k4, (Cout,), jnp.float32)
    beta = 0.1 * jax.random.normal(k5, (Cout,), jnp.float32)

    out = basic_conv2d(x, weight, bias, gamma, beta,
                       stride=stride, padding=padding)
    out = jax.block_until_ready(out)

    assert out.shape == (N, Cout, H, W)
    assert out.dtype == jnp.float32

    # ---- pure-JAX references (Conv2d + training-mode BatchNorm2d + ReLU) ----
    def conv_ref(xr, wr):
        return jax.lax.conv_general_dilated(
            xr, wr, window_strides=(stride, stride),
            padding=[(padding, padding), (padding, padding)],
            dimension_numbers=("NCHW", "OIHW", "NCHW"),
            precision=jax.lax.Precision.HIGHEST)

    def bn_relu_ref(conv_for_stats, y):
        m = conv_for_stats.mean(axis=(0, 2, 3), keepdims=True)
        v = conv_for_stats.var(axis=(0, 2, 3), keepdims=True)
        g = gamma.reshape(1, Cout, 1, 1)
        b = beta.reshape(1, Cout, 1, 1)
        return jnp.maximum((y - m) * jax.lax.rsqrt(v + 1e-5) * g + b, 0.0)

    bf16 = lambda a: a.astype(jnp.bfloat16).astype(jnp.float32)

    # (1) Numerics check: a reference mirroring the kernel's arithmetic
    #     (bf16 operands, f32 accumulation/stats, bf16 intermediate; conv bias
    #     omitted since training-mode BN cancels it exactly).
    conv_m = conv_ref(bf16(x), bf16(weight))
    ref_mirror = bn_relu_ref(conv_m, bf16(conv_m))
    err = jnp.abs(out - ref_mirror)
    assert float(jnp.mean(err)) < 1e-3, float(jnp.mean(err))
    assert float(jnp.max(err)) < 5e-2, float(jnp.max(err))

    # (2) Semantic check vs. the full-f32 PyTorch module (bf16-path tolerance).
    conv_f = conv_ref(x, weight) + bias.reshape(1, Cout, 1, 1)
    ref_f32 = bn_relu_ref(conv_f, conv_f)
    assert jnp.allclose(out, ref_f32, atol=5e-2, rtol=5e-2), \
        float(jnp.max(jnp.abs(out - ref_f32)))

    print("KERNEL_OK")
</pallas_src>

<mosaic_0001>
module attributes {stable_mosaic.version = 11 : i64} {
  func.func @kernel(%arg0: i32, %arg1: i32, %arg2: memref<1x18x72xbf16, #tpu.memory_space<vmem>>, %arg3: memref<36x128xbf16, #tpu.memory_space<vmem>>, %arg4: memref<1x128x128xbf16, #tpu.memory_space<vmem>>, %arg5: memref<1x1x2x128xf32, #tpu.memory_space<vmem>>) attributes {dimension_semantics = [#tpu.dimension_semantics<parallel>, #tpu.dimension_semantics<parallel>], iteration_bounds = array<i64: 2, 2>, scalar_prefetch = 0 : i64, scratch_operands = 0 : i64, tpu.core_type = #tpu.core_type<tc>, window_params = [{transform_indices = @transform_0, window_bounds = array<i64: 1, 18, 72>}, {pipeline_mode = #tpu.pipeline_mode<synchronous>, transform_indices = @transform_1, window_bounds = array<i64: 36, 128>}, {transform_indices = @transform_2, window_bounds = array<i64: 1, 128, 128>}, {transform_indices = @transform_3, window_bounds = array<i64: 1, 1, 2, 128>}]} {
    %c8_i32 = arith.constant 8 : i32
    %0 = arith.muli %arg1, %c8_i32 : i32
    %1 = tpu.assume_multiple %0, 8 : i32
    %c0 = arith.constant 0 : index
    %2 = arith.index_cast %1 : i32 to index
    %c0_0 = arith.constant 0 : index
    %3 = vector.load %arg2[%c0, %2, %c0_0] : memref<1x18x72xbf16, #tpu.memory_space<vmem>>, vector<1x10x72xbf16>
    %4 = vector.shape_cast %3 : vector<1x10x72xbf16> to vector<10x72xbf16>
    %5 = vector.extract_strided_slice %4 {offsets = [0, 0], sizes = [8, 72], strides = [1, 1]} : vector<10x72xbf16> to vector<8x72xbf16>
    %6 = vector.extract_strided_slice %5 {offsets = [0, 0], sizes = [8, 64], strides = [1, 1]} : vector<8x72xbf16> to vector<8x64xbf16>
    %7 = vector.shape_cast %6 : vector<8x64xbf16> to vector<8x16x4xbf16>
    %8 = vector.extract_strided_slice %5 {offsets = [0, 4], sizes = [8, 64], strides = [1, 1]} : vector<8x72xbf16> to vector<8x64xbf16>
    %9 = vector.shape_cast %8 : vector<8x64xbf16> to vector<8x16x4xbf16>
    %10 = vector.extract_strided_slice %5 {offsets = [0, 8], sizes = [8, 64], strides = [1, 1]} : vector<8x72xbf16> to vector<8x64xbf16>
    %11 = vector.shape_cast %10 : vector<8x64xbf16> to vector<8x16x4xbf16>
    %12 = vector.extract_strided_slice %4 {offsets = [1, 0], sizes = [8, 72], strides = [1, 1]} : vector<10x72xbf16> to vector<8x72xbf16>
    %13 = vector.extract_strided_slice %12 {offsets = [0, 0], sizes = [8, 64], strides = [1, 1]} : vector<8x72xbf16> to vector<8x64xbf16>
    %14 = vector.shape_cast %13 : vector<8x64xbf16> to vector<8x16x4xbf16>
    %15 = vector.extract_strided_slice %12 {offsets = [0, 4], sizes = [8, 64], strides = [1, 1]} : vector<8x72xbf16> to vector<8x64xbf16>
    %16 = vector.shape_cast %15 : vector<8x64xbf16> to vector<8x16x4xbf16>
    %17 = vector.extract_strided_slice %12 {offsets = [0, 8], sizes = [8, 64], strides = [1, 1]} : vector<8x72xbf16> to vector<8x64xbf16>
    %18 = vector.shape_cast %17 : vector<8x64xbf16> to vector<8x16x4xbf16>
    %19 = vector.extract_strided_slice %4 {offsets = [2, 0], sizes = [8, 72], strides = [1, 1]} : vector<10x72xbf16> to vector<8x72xbf16>
    %20 = vector.extract_strided_slice %19 {offsets = [0, 0], sizes = [8, 64], strides = [1, 1]} : vector<8x72xbf16> to vector<8x64xbf16>
    %21 = vector.shape_cast %20 : vector<8x64xbf16> to vector<8x16x4xbf16>
    %22 = vector.extract_strided_slice %19 {offsets = [0, 4], sizes = [8, 64], strides = [1, 1]} : vector<8x72xbf16> to vector<8x64xbf16>
    %23 = vector.shape_cast %22 : vector<8x64xbf16> to vector<8x16x4xbf16>
    %24 = vector.extract_strided_slice %19 {offsets = [0, 8], sizes = [8, 64], strides = [1, 1]} : vector<8x72xbf16> to vector<8x64xbf16>
    %25 = vector.shape_cast %24 : vector<8x64xbf16> to vector<8x16x4xbf16>
    %26 = tpu.concatenate %7, %9, %11, %14, %16, %18, %21, %23, %25 in 2 : vector<8x16x4xbf16>, vector<8x16x4xbf16>, vector<8x16x4xbf16>, vector<8x16x4xbf16>, vector<8x16x4xbf16>, vector<8x16x4xbf16>, vector<8x16x4xbf16>, vector<8x16x4xbf16>, vector<8x16x4xbf16> -> vector<8x16x36xbf16>
    %27 = vector.shape_cast %26 : vector<8x16x36xbf16> to vector<128x36xbf16>
    %c0_1 = arith.constant 0 : index
    %c0_2 = arith.constant 0 : index
    %28 = vector.load %arg3[%c0_1, %c0_2] : memref<36x128xbf16, #tpu.memory_space<vmem>>, vector<36x128xbf16>
    %cst = arith.constant dense<0.000000e+00> : vector<128x128xf32>
    %29 = tpu.matmul %27, %28, %cst {dimension_numbers = #tpu.dot_dimension_numbers<[1], [0], [0], [1], [0, 0, 1, 1], [], []>} : vector<128x36xbf16>, vector<36x128xbf16>, vector<128x128xf32> -> vector<128x128xf32>
    %30 = arith.truncf %29 : vector<128x128xf32> to vector<128x128xbf16>
    %c0_3 = arith.constant 0 : index
    %c0_4 = arith.constant 0 : index
    %c0_5 = arith.constant 0 : index
    %31 = vector.load %arg4[%c0_3, %c0_4, %c0_5] : memref<1x128x128xbf16, #tpu.memory_space<vmem>>, vector<1x128x128xbf16>
    %32 = vector.shape_cast %31 : vector<1x128x128xbf16> to vector<128x128xbf16>
    %33 = vector.shape_cast %30 : vector<128x128xbf16> to vector<1x128x128xbf16>
    tpu.vector_store %arg4[%c0_3, %c0_4, %c0_5], %33 {strides = array<i32>} : memref<1x128x128xbf16, #tpu.memory_space<vmem>>, vector<1x128x128xbf16>,
    %cst_6 = arith.constant dense<0.000000e+00> : vector<128xf32>
    %34 = vector.multi_reduction <add>, %29, %cst_6 [0] : vector<128x128xf32> to vector<128xf32>
    %35 = vector.shape_cast %34 : vector<128xf32> to vector<1x128xf32>
    %cst_7 = arith.constant 7.812500e-03 : f32
    %36 = vector.broadcast %cst_7 : f32 to vector<1x128xf32>
    %37 = arith.mulf %35, %36 : vector<1x128xf32>
    %38 = vector.broadcast %37 : vector<1x128xf32> to vector<128x128xf32>
    %39 = arith.subf %29, %38 : vector<128x128xf32>
    %40 = arith.mulf %39, %39 : vector<128x128xf32>
    %cst_8 = arith.constant dense<0.000000e+00> : vector<128xf32>
    %41 = vector.multi_reduction <add>, %40, %cst_8 [0] : vector<128x128xf32> to vector<128xf32>
    %42 = vector.shape_cast %41 : vector<128xf32> to vector<1x128xf32>
    %43 = tpu.concatenate %35, %42 in 0 : vector<1x128xf32>, vector<1x128xf32> -> vector<2x128xf32>
    %c0_9 = arith.constant 0 : index
    %c0_10 = arith.constant 0 : index
    %c0_11 = arith.constant 0 : index
    %c0_12 = arith.constant 0 : index
    %44 = vector.load %arg5[%c0_9, %c0_10, %c0_11, %c0_12] : memref<1x1x2x128xf32, #tpu.memory_space<vmem>>, vector<1x1x2x128xf32>
    %45 = vector.shape_cast %44 : vector<1x1x2x128xf32> to vector<2x128xf32>
    %46 = vector.shape_cast %43 : vector<2x128xf32> to vector<1x1x2x128xf32>
    tpu.vector_store %arg5[%c0_9, %c0_10, %c0_11, %c0_12], %46 {strides = array<i32>} : memref<1x1x2x128xf32, #tpu.memory_space<vmem>>, vector<1x1x2x128xf32>,
    return
  }
  func.func @transform_0(%arg0: i32, %arg1: i32) -> (i32, i32, i32) {
    %c0_i32 = arith.constant 0 : i32
    %c0_i32_0 = arith.constant 0 : i32
    %c0_i32_1 = arith.constant 0 : i32
    return %arg0, %c0_i32, %c0_i32_0 : i32, i32, i32
  }
  func.func @transform_1(%arg0: i32, %arg1: i32) -> (i32, i32) {
    %c0_i32 = arith.constant 0 : i32
    %c0_i32_0 = arith.constant 0 : i32
    %c0_i32_1 = arith.constant 0 : i32
    return %c0_i32, %c0_i32_0 : i32, i32
  }
  func.func @transform_2(%arg0: i32, %arg1: i32) -> (i32, i32, i32) {
    %c0_i32 = arith.constant 0 : i32
    %c0_i32_0 = arith.constant 0 : i32
    return %arg0, %arg1, %c0_i32 : i32, i32, i32
  }
  func.func @transform_3(%arg0: i32, %arg1: i32) -> (i32, i32, i32, i32) {
    %c0_i32 = arith.constant 0 : i32
    %c0_i32_0 = arith.constant 0 : i32
    %c0_i32_1 = arith.constant 0 : i32
    return %arg0, %arg1, %c0_i32, %c0_i32_0 : i32, i32, i32, i32
  }
}

module attributes {stable_mosaic.version = 11 : i64} {
  func.func @kernel(%arg0: i32, %arg1: i32, %arg2: memref<1x256x128xbf16, #tpu.memory_space<vmem>>, %arg3: memref<1x128xf32, #tpu.memory_space<vmem>>, %arg4: memref<1x128xf32, #tpu.memory_space<vmem>>, %arg5: memref<1x8x256xf32, #tpu.memory_space<vmem>>) attributes {dimension_semantics = [#tpu.dimension_semantics<parallel>, #tpu.dimension_semantics<parallel>], iteration_bounds = array<i64: 2, 1>, scalar_prefetch = 0 : i64, scratch_operands = 0 : i64, tpu.core_type = #tpu.core_type<tc>, window_params = [{transform_indices = @transform_0, window_bounds = array<i64: 1, 256, 128>}, {pipeline_mode = #tpu.pipeline_mode<synchronous>, transform_indices = @transform_1, window_bounds = array<i64: 1, 128>}, {pipeline_mode = #tpu.pipeline_mode<synchronous>, transform_indices = @transform_2, window_bounds = array<i64: 1, 128>}, {transform_indices = @transform_3, window_bounds = array<i64: 1, 8, 256>}]} {
    %c0 = arith.constant 0 : index
    %c0_0 = arith.constant 0 : index
    %c0_1 = arith.constant 0 : index
    %0 = vector.load %arg2[%c0, %c0_0, %c0_1] : memref<1x256x128xbf16, #tpu.memory_space<vmem>>, vector<1x256x128xbf16>
    %1 = vector.shape_cast %0 : vector<1x256x128xbf16> to vector<256x128xbf16>
    %2 = arith.extf %1 : vector<256x128xbf16> to vector<256x128xf32>
    %c0_2 = arith.constant 0 : index
    %c0_3 = arith.constant 0 : index
    %3 = vector.load %arg3[%c0_2, %c0_3] : memref<1x128xf32, #tpu.memory_space<vmem>>, vector<1x128xf32>
    %4 = vector.broadcast %3 : vector<1x128xf32> to vector<256x128xf32>
    %5 = arith.mulf %2, %4 : vector<256x128xf32>
    %c0_4 = arith.constant 0 : index
    %c0_5 = arith.constant 0 : index
    %6 = vector.load %arg4[%c0_4, %c0_5] : memref<1x128xf32, #tpu.memory_space<vmem>>, vector<1x128xf32>
    %7 = vector.broadcast %6 : vector<1x128xf32> to vector<256x128xf32>
    %8 = arith.addf %5, %7 : vector<256x128xf32>
    %cst = arith.constant 0.000000e+00 : f32
    %9 = vector.broadcast %cst : f32 to vector<256x128xf32>
    %10 = arith.maximumf %8, %9 : vector<256x128xf32>
    %11 = tpu.transpose %10, [1, 0] : vector<256x128xf32> -> vector<128x256xf32>
    %12 = vector.extract_strided_slice %11 {offsets = [0, 0], sizes = [8, 256], strides = [1, 1]} : vector<128x256xf32> to vector<8x256xf32>
    %c0_6 = arith.constant 0 : index
    %c0_7 = arith.constant 0 : index
    %c0_8 = arith.constant 0 : index
    %13 = vector.load %arg5[%c0_6, %c0_7, %c0_8] : memref<1x8x256xf32, #tpu.memory_space<vmem>>, vector<1x8x256xf32>
    %14 = vector.shape_cast %13 : vector<1x8x256xf32> to vector<8x256xf32>
    %15 = vector.shape_cast %12 : vector<8x256xf32> to vector<1x8x256xf32>
    tpu.vector_store %arg5[%c0_6, %c0_7, %c0_8], %15 {strides = array<i32>} : memref<1x8x256xf32, #tpu.memory_space<vmem>>, vector<1x8x256xf32>,
    return
  }
  func.func @transform_0(%arg0: i32, %arg1: i32) -> (i32, i32, i32) {
    %c0_i32 = arith.constant 0 : i32
    %c0_i32_0 = arith.constant 0 : i32
    return %arg0, %arg1, %c0_i32 : i32, i32, i32
  }
  func.func @transform_1(%arg0: i32, %arg1: i32) -> (i32, i32) {
    %c0_i32 = arith.constant 0 : i32
    %c0_i32_0 = arith.constant 0 : i32
    %c0_i32_1 = arith.constant 0 : i32
    return %c0_i32, %c0_i32_0 : i32, i32
  }
  func.func @transform_2(%arg0: i32, %arg1: i32) -> (i32, i32) {
    %c0_i32 = arith.constant 0 : i32
    %c0_i32_0 = arith.constant 0 : i32
    %c0_i32_1 = arith.constant 0 : i32
    return %c0_i32, %c0_i32_0 : i32, i32
  }
  func.func @transform_3(%arg0: i32, %arg1: i32) -> (i32, i32, i32) {
    %c0_i32 = arith.constant 0 : i32
    %c0_i32_0 = arith.constant 0 : i32
    return %arg0, %c0_i32, %arg1 : i32, i32, i32
  }
}

</mosaic_0001>

<llo_original>
// kernel: basic_conv2d.3
$region0: #{basic_conv2d.3}
  #allocation0 [shape = 'u32[]', space=smem, size = 0x4, offset = 0x4, fixed_abs, tag = 'smem constant byte address 0x4 - core index']
  #allocation1 [shape = 'u32[72,128]{1,0:T(1,128)}', space=vmem, size = 0x9000, scoped, tag = 'internal scratch']
  %s0 = inlined_call_operand.vmem [shape: bf16[2,256,128], index: 0, kind: input, shape index: {}]
  %s1 = inlined_call_operand.vmem [shape: f32[1,128], index: 1, kind: input, shape index: {}]
  %s2 = inlined_call_operand.vmem [shape: f32[1,128], index: 2, kind: input, shape index: {}]
  %s3 = inlined_call_operand.vmem [shape: f32[2,8,256], index: 3, kind: output, shape index: {}]
  %s4 = sld [smem:[#allocation0]]
  $region45: #{basic_conv2d.3} parent=0
    _
  %s6 = ssub.s32 1, %s4
  %s7 = scalar_select 0, %s6, %s4
  loop: start=0, step=1, limit=4
  $region2: #{basic_conv2d.3} parent=0 // loop_pre_header
    _
  $region3: #{basic_conv2d.3} parent=0 // loop_header
    %s9 = sphi 0, %s13
    %p10 = scmp.ge.s32.totalorder %s9, 4
    %s16 = sphi 0, %s28
    %s17 = sphi 0, %s24
    %s18 = sphi 0, %s16
    %s19 = sphi 0, %s17
    %s20 = sphi 0, %s18
    %s21 = sphi 0, %s19
    %s33 = sphi 0, %s35
    %s36 = sphi 0, %s33
    %s37 = sphi 0, %s36
    %s53 = sphi 0, %s37
    %s57 = sphi 0, %s57
    %s59 = sphi 0, %s57
    %s60 = sphi 0, %s59
    %s74 = sphi 0, %s60
    %s78 = sphi 0, %s78
    %s80 = sphi 0, %s78
    %s81 = sphi 0, %s80
    %s95 = sphi 0, %s81
    %s103 = sphi 0, %s105
    %s106 = sphi 0, %s103
    %s107 = sphi 0, %s106
    %s123 = sphi 0, %s107
  $region4: #{basic_conv2d.3} parent=0 // loop_header_branch
    %12 = sbr.rel (%p10) target = $region8
  $region5: #{basic_conv2d.3} parent=0 // loop_body
    %s14 = ssub.s32 %s9, 1
    %s15 = ssub.s32 %s9, 2
    %s22 = sadd.s32 1, %s17
    %p23 = scmp.ge.s32.totalorder %s22, 1
    %s24 = scalar_select %p23, 0, %s22
    %s25 = sadd.s32 1, %s16
    %s26 = scalar_select %p23, %s25, %s16
    %p27 = scmp.ge.s32.totalorder %s26, 2
    %s28 = scalar_select %p27, 0, %s26
    %s29 = ssub.s32 %s16, %s28
    %s30 = ssub.s32 %s17, %s24
    %s31 = sor.u32 %s29, %s30
    %p32 = scmp.eq.s32.totalorder %s31, 0
    %s34 = sadd.s32 %s33, 1
    %s35 = scalar_select %p32, %s33, %s34
    %p38 = pneg %p32
    %p39 = scmp.eq.s32.totalorder %s9, 1
    %p40 = por %p38, %p39
    %p41 = scmp.ne.s32.totalorder %s33, %s36
    %p42 = scmp.eq.s32.totalorder %s9, 0
    %p43 = por %p41, %p42
    %p44 = scmp.ne.s32.totalorder %s33, %s36
    %p45 = scmp.eq.s32.totalorder %s14, 1
    %p46 = por %p44, %p45
    %p47 = scmp.ne.s32.totalorder %s36, %s37
    %p48 = scmp.eq.s32.totalorder %s14, 0
    %p49 = por %p47, %p48
    %p50 = scmp.ne.s32.totalorder %s36, %s37
    %p51 = scmp.eq.s32.totalorder %s15, 1
    %p52 = por %p50, %p51
    %p54 = scmp.ne.s32.totalorder %s37, %s53
    %p55 = scmp.eq.s32.totalorder %s15, 0
    %p56 = por %p54, %p55
    %s58 = sadd.s32 %s57, 1
    %p61 = scmp.eq.s32.totalorder %s9, 1
    %p62 = scmp.ne.s32.totalorder %s57, %s59
    %p63 = scmp.eq.s32.totalorder %s9, 0
    %p64 = por %p62, %p63
    %p65 = scmp.ne.s32.totalorder %s57, %s59
    %p66 = scmp.eq.s32.totalorder %s14, 1
    %p67 = por %p65, %p66
    %p68 = scmp.ne.s32.totalorder %s59, %s60
    %p69 = scmp.eq.s32.totalorder %s14, 0
    %p70 = por %p68, %p69
    %p71 = scmp.ne.s32.totalorder %s59, %s60
    %p72 = scmp.eq.s32.totalorder %s15, 1
    %p73 = por %p71, %p72
    %p75 = scmp.ne.s32.totalorder %s60, %s74
    %p76 = scmp.eq.s32.totalorder %s15, 0
    %p77 = por %p75, %p76
    %s79 = sadd.s32 %s78, 1
    %p82 = scmp.eq.s32.totalorder %s9, 1
    %p83 = scmp.ne.s32.totalorder %s78, %s80
    %p84 = scmp.eq.s32.totalorder %s9, 0
    %p85 = por %p83, %p84
    %p86 = scmp.ne.s32.totalorder %s78, %s80
    %p87 = scmp.eq.s32.totalorder %s14, 1
    %p88 = por %p86, %p87
    %p89 = scmp.ne.s32.totalorder %s80, %s81
    %p90 = scmp.eq.s32.totalorder %s14, 0
    %p91 = por %p89, %p90
    %p92 = scmp.ne.s32.totalorder %s80, %s81
    %p93 = scmp.eq.s32.totalorder %s15, 1
    %p94 = por %p92, %p93
    %p96 = scmp.ne.s32.totalorder %s81, %s95
    %p97 = scmp.eq.s32.totalorder %s15, 0
    %p98 = por %p96, %p97
    %s99 = ssub.s32 %s16, %s28
    %s100 = ssub.s32 %s17, %s24
    %s101 = sor.u32 %s99, %s100
    %p102 = scmp.eq.s32.totalorder %s101, 0
    %s104 = sadd.s32 %s103, 1
    %s105 = scalar_select %p102, %s103, %s104
    %p108 = pneg %p102
    %p109 = scmp.eq.s32.totalorder %s9, 1
    %p110 = por %p108, %p109
    %p111 = scmp.ne.s32.totalorder %s103, %s106
    %p112 = scmp.eq.s32.totalorder %s9, 0
    %p113 = por %p111, %p112
    %p114 = scmp.ne.s32.totalorder %s103, %s106
    %p115 = scmp.eq.s32.totalorder %s14, 1
    %p116 = por %p114, %p115
    %p117 = scmp.ne.s32.totalorder %s106, %s107
    %p118 = scmp.eq.s32.totalorder %s14, 0
    %p119 = por %p117, %p118
    %p120 = scmp.ne.s32.totalorder %s106, %s107
    %p121 = scmp.eq.s32.totalorder %s15, 1
    %p122 = por %p120, %p121
    %p124 = scmp.ne.s32.totalorder %s107, %s123
    %p125 = scmp.eq.s32.totalorder %s15, 0
    %p126 = por %p124, %p125
    %p127 = scmp.le.s32.totalorder 1, %s9
    %p128 = scmp.lt.s32.totalorder %s9, 3
    %p129 = pnand %p127, %p128
    %p130 = pneg %p129
    // Predicated region
    $region9: #{basic_conv2d.3} parent=5 // pred_check
      _
    $region10: #{basic_conv2d.3} parent=5 // pred_check_branch
      %132 = sbr.rel (%p129) target = $region12
    $region11: #{basic_conv2d.3} parent=5 // pred_region
      %s133 = ssub.s32 %s9, 1
      // Predicated region
      $region13: #{basic_conv2d.3} parent=11 // pred_check
        %p134 = pneg %p70
      $region14: #{basic_conv2d.3} parent=11 // pred_check_branch
        %136 = sbr.rel (%p134) target = $region16
      $region15: #{basic_conv2d.3} parent=11 // pred_region
        _
      $region16: #{basic_conv2d.3} parent=11 // pred_fallthru
        _
      // Predicated region
      $region17: #{basic_conv2d.3} parent=11 // pred_check
        %p137 = pneg %p91
      $region18: #{basic_conv2d.3} parent=11 // pred_check_branch
        %139 = sbr.rel (%p137) target = $region20
      $region19: #{basic_conv2d.3} parent=11 // pred_region
        _
      $region20: #{basic_conv2d.3} parent=11 // pred_fallthru
        _
    $region12: #{basic_conv2d.3} parent=5 // pred_fallthru
      _
    %p140 = scmp.lt.s32.totalorder %s9, 2
    // Predicated region
    $region21: #{basic_conv2d.3} parent=5 // pred_check
      %p141 = pneg %p140
    $region22: #{basic_conv2d.3} parent=5 // pred_check_branch
      %143 = sbr.rel (%p141) target = $region24
    $region23: #{basic_conv2d.3} parent=5 // pred_region
      // Predicated region
      $region25: #{basic_conv2d.3} parent=23 // pred_check
        %p144 = pneg %p43
      $region26: #{basic_conv2d.3} parent=23 // pred_check_branch
        %146 = sbr.rel (%p144) target = $region28
      $region27: #{basic_conv2d.3} parent=23 // pred_region
        %s147 = smul.u32 32, %s17
        %p148 = scmp.lt.s32.totalorder %s16, 1
        %s149 = scalar_select %p148, %s16, 1
        %p150 = scmp.lt.s32.totalorder %s147, 31
        %s151 = scalar_select %p150, %s147, 31
        %s152 = smul.addr %s149, 32
        %s153 = sadd.s32 %s151, %s152
        %s154 = smul.addr %s153, 4
        %s155 = scalar_lea.vmem %s0, %s154
        %s156 = smul.u32 32, %s17
      $region28: #{basic_conv2d.3} parent=23 // pred_fallthru
        _
    $region24: #{basic_conv2d.3} parent=5 // pred_fallthru
      _
    %p157 = scmp.le.s32.totalorder 1, %s9
    %p158 = scmp.lt.s32.totalorder %s9, 3
    %p159 = pnand %p157, %p158
    %p160 = pneg %p159
    // Predicated region
    $region29: #{basic_conv2d.3} parent=5 // pred_check
      _
    $region30: #{basic_conv2d.3} parent=5 // pred_check_branch
      %162 = sbr.rel (%p159) target = $region32
    $region31: #{basic_conv2d.3} parent=5 // pred_region
      %s163 = ssub.s32 %s9, 1
      %s164 = smul.u32 32, %s19
      %p165 = scmp.lt.s32.totalorder %s18, 1
      %s166 = scalar_select %p165, %s18, 1
      %p167 = scmp.lt.s32.totalorder %s164, 31
      %s168 = scalar_select %p167, %s164, 31
      %s169 = smul.addr %s166, 32
      %s170 = sadd.s32 %s168, %s169
      %s171 = smul.addr %s170, 4
      %s172 = scalar_lea.vmem %s0, %s171
      %p173 = pneg %p49
      %p174 = pneg %p46
      %p175 = pneg %p70
      %p176 = pneg %p67
      %p177 = pneg %p91
      %p178 = pneg %p88
      %p179 = pneg %p119
      %p180 = pneg %p116
      %s181 = smul.u32 2, %s19
      %p182 = scmp.lt.s32.totalorder %s18, 1
      %s183 = scalar_select %p182, %s18, 1
      %p184 = scmp.lt.s32.totalorder %s181, 1
      %s185 = scalar_select %p184, %s181, 1
      %s186 = smul.addr %s183, 2
      %s187 = sadd.s32 %s185, %s186
      %s188 = smul.addr %s187, 8
      %s189 = scalar_lea.vmem %s3, %s188
      %s190 = smul.u32 32, %s19
      %p191 = scmp.lt.s32.totalorder %s18, 1
      %s192 = scalar_select %p191, %s18, 1
      %p193 = scmp.lt.s32.totalorder %s190, 31
      %s194 = scalar_select %p193, %s190, 31
      %s195 = smul.addr %s192, 32
      %s196 = sadd.s32 %s194, %s195
      %s197 = smul.addr %s196, 4
      %s198 = scalar_lea.vmem %s0, %s197
      %s199 = smul.u32 32, %s19
      %s200 = smul.u32 2, %s19
      %p201 = scmp.lt.s32.totalorder %s18, 1
      %s202 = scalar_select %p201, %s18, 1
      %p203 = scmp.lt.s32.totalorder %s200, 1
      %s204 = scalar_select %p203, %s200, 1
      %s205 = smul.addr %s202, 2
      %s206 = sadd.s32 %s204, %s205
      %s207 = smul.addr %s206, 8
      %s208 = scalar_lea.vmem %s3, %s207
      %s209 = smul.u32 2, %s19
      %v210 = vld [vmem:[%s198] sm:$0xf]
      %v211 = vld [vmem:[%s198 + $0x4] sm:$0xf]
      %v212 = vld [vmem:[%s198 + $0x8] sm:$0xf]
      %v213 = vld [vmem:[%s198 + $0xc] sm:$0xf]
      %v214 = vld [vmem:[%s198 + $0x10] sm:$0xf]
      %v215 = vld [vmem:[%s198 + $0x14] sm:$0xf]
      %v216 = vld [vmem:[%s198 + $0x18] sm:$0xf]
      %v217 = vld [vmem:[%s198 + $0x1c] sm:$0xf]
      %v218 = vld [vmem:[%s198 + $0x20] sm:$0xf]
      %v219 = vld [vmem:[%s198 + $0x24] sm:$0xf]
      %v220 = vld [vmem:[%s198 + $0x28] sm:$0xf]
      %v221 = vld [vmem:[%s198 + $0x2c] sm:$0xf]
      %v222 = vld [vmem:[%s198 + $0x30] sm:$0xf]
      %v223 = vld [vmem:[%s198 + $0x34] sm:$0xf]
      %v224 = vld [vmem:[%s198 + $0x38] sm:$0xf]
      %v225 = vld [vmem:[%s198 + $0x3c] sm:$0xf]
      %v226 = vld [vmem:[%s198 + $0x40] sm:$0xf]
      %v227 = vld [vmem:[%s198 + $0x44] sm:$0xf]
      %v228 = vld [vmem:[%s198 + $0x48] sm:$0xf]
      %v229 = vld [vmem:[%s198 + $0x4c] sm:$0xf]
      %v230 = vld [vmem:[%s198 + $0x50] sm:$0xf]
      %v231 = vld [vmem:[%s198 + $0x54] sm:$0xf]
      %v232 = vld [vmem:[%s198 + $0x58] sm:$0xf]
      %v233 = vld [vmem:[%s198 + $0x5c] sm:$0xf]
      %v234 = vld [vmem:[%s198 + $0x60] sm:$0xf]
      %v235 = vld [vmem:[%s198 + $0x64] sm:$0xf]
      %v236 = vld [vmem:[%s198 + $0x68] sm:$0xf]
      %v237 = vld [vmem:[%s198 + $0x6c] sm:$0xf]
      %v238 = vld [vmem:[%s198 + $0x70] sm:$0xf]
      %v239 = vld [vmem:[%s198 + $0x74] sm:$0xf]
      %v240 = vld [vmem:[%s198 + $0x78] sm:$0xf]
      %v241 = vld [vmem:[%s198 + $0x7c] sm:$0xf]
      %v242 = vunpack.c.l.bf16 %v210
      %v243 = vunpack.c.l.bf16 %v211
      %v244 = vunpack.c.l.bf16 %v212
      %v245 = vunpack.c.l.bf16 %v213
      %v246 = vunpack.c.l.bf16 %v214
      %v247 = vunpack.c.l.bf16 %v215
      %v248 = vunpack.c.l.bf16 %v216
      %v249 = vunpack.c.l.bf16 %v217
      %v250 = vunpack.c.l.bf16 %v218
      %v251 = vunpack.c.l.bf16 %v219
      %v252 = vunpack.c.l.bf16 %v220
      %v253 = vunpack.c.l.bf16 %v221
      %v254 = vunpack.c.l.bf16 %v222
      %v255 = vunpack.c.l.bf16 %v223
      %v256 = vunpack.c.l.bf16 %v224
      %v257 = vunpack.c.l.bf16 %v225
      %v258 = vunpack.c.l.bf16 %v226
      %v259 = vunpack.c.l.bf16 %v227
      %v260 = vunpack.c.l.bf16 %v228
      %v261 = vunpack.c.l.bf16 %v229
      %v262 = vunpack.c.l.bf16 %v230
      %v263 = vunpack.c.l.bf16 %v231
      %v264 = vunpack.c.l.bf16 %v232
      %v265 = vunpack.c.l.bf16 %v233
      %v266 = vunpack.c.l.bf16 %v234
      %v267 = vunpack.c.l.bf16 %v235
      %v268 = vunpack.c.l.bf16 %v236
      %v269 = vunpack.c.l.bf16 %v237
      %v270 = vunpack.c.l.bf16 %v238
      %v271 = vunpack.c.l.bf16 %v239
      %v272 = vunpack.c.l.bf16 %v240
      %v273 = vunpack.c.l.bf16 %v241
      %v274 = vld [vmem:[%s1] sm:$0x1]
      %v276 = vperm.slane %v274, 0
      %v278 = vmul.f32 %v242, %v276
      %v279 = vmul.f32 %v243, %v276
      %v280 = vmul.f32 %v244, %v276
      %v281 = vmul.f32 %v245, %v276
      %v282 = vmul.f32 %v246, %v276
      %v283 = vmul.f32 %v247, %v276
      %v284 = vmul.f32 %v248, %v276
      %v285 = vmul.f32 %v249, %v276
      %v286 = vmul.f32 %v250, %v276
      %v287 = vmul.f32 %v251, %v276
      %v288 = vmul.f32 %v252, %v276
      %v289 = vmul.f32 %v253, %v276
      %v290 = vmul.f32 %v254, %v276
      %v291 = vmul.f32 %v255, %v276
      %v292 = vmul.f32 %v256, %v276
      %v293 = vmul.f32 %v257, %v276
      %v294 = vmul.f32 %v258, %v276
      %v295 = vmul.f32 %v259, %v276
      %v296 = vmul.f32 %v260, %v276
      %v297 = vmul.f32 %v261, %v276
      %v298 = vmul.f32 %v262, %v276
      %v299 = vmul.f32 %v263, %v276
      %v300 = vmul.f32 %v264, %v276
      %v301 = vmul.f32 %v265, %v276
      %v302 = vmul.f32 %v266, %v276
      %v303 = vmul.f32 %v267, %v276
      %v304 = vmul.f32 %v268, %v276
      %v305 = vmul.f32 %v269, %v276
      %v306 = vmul.f32 %v270, %v276
      %v307 = vmul.f32 %v271, %v276
      %v308 = vmul.f32 %v272, %v276
      %v309 = vmul.f32 %v273, %v276
      %v310 = vld [vmem:[%s2] sm:$0x1]
      %v312 = vperm.slane %v310, 0
      %v314 = vadd.f32 %v278, %v312
      %v315 = vadd.f32 %v279, %v312
      %v316 = vadd.f32 %v280, %v312
      %v317 = vadd.f32 %v281, %v312
      %v318 = vadd.f32 %v282, %v312
      %v319 = vadd.f32 %v283, %v312
      %v320 = vadd.f32 %v284, %v312
      %v321 = vadd.f32 %v285, %v312
      %v322 = vadd.f32 %v286, %v312
      %v323 = vadd.f32 %v287, %v312
      %v324 = vadd.f32 %v288, %v312
      %v325 = vadd.f32 %v289, %v312
      %v326 = vadd.f32 %v290, %v312
      %v327 = vadd.f32 %v291, %v312
      %v328 = vadd.f32 %v292, %v312
      %v329 = vadd.f32 %v293, %v312
      %v330 = vadd.f32 %v294, %v312
      %v331 = vadd.f32 %v295, %v312
      %v332 = vadd.f32 %v296, %v312
      %v333 = vadd.f32 %v297, %v312
      %v334 = vadd.f32 %v298, %v312
      %v335 = vadd.f32 %v299, %v312
      %v336 = vadd.f32 %v300, %v312
      %v337 = vadd.f32 %v301, %v312
      %v338 = vadd.f32 %v302, %v312
      %v339 = vadd.f32 %v303, %v312
      %v340 = vadd.f32 %v304, %v312
      %v341 = vadd.f32 %v305, %v312
      %v342 = vadd.f32 %v306, %v312
      %v343 = vadd.f32 %v307, %v312
      %v344 = vadd.f32 %v308, %v312
      %v345 = vadd.f32 %v309, %v312
      %v346 = vmax.f32 %v314, 0.0
      %v347 = vmax.f32 %v315, 0.0
      %v348 = vmax.f32 %v316, 0.0
      %v349 = vmax.f32 %v317, 0.0
      %v350 = vmax.f32 %v318, 0.0
      %v351 = vmax.f32 %v319, 0.0
      %v352 = vmax.f32 %v320, 0.0
      %v353 = vmax.f32 %v321, 0.0
      %v354 = vmax.f32 %v322, 0.0
      %v355 = vmax.f32 %v323, 0.0
      %v356 = vmax.f32 %v324, 0.0
      %v357 = vmax.f32 %v325, 0.0
      %v358 = vmax.f32 %v326, 0.0
      %v359 = vmax.f32 %v327, 0.0
      %v360 = vmax.f32 %v328, 0.0
      %v361 = vmax.f32 %v329, 0.0
      %v362 = vmax.f32 %v330, 0.0
      %v363 = vmax.f32 %v331, 0.0
      %v364 = vmax.f32 %v332, 0.0
      %v365 = vmax.f32 %v333, 0.0
      %v366 = vmax.f32 %v334, 0.0
      %v367 = vmax.f32 %v335, 0.0
      %v368 = vmax.f32 %v336, 0.0
      %v369 = vmax.f32 %v337, 0.0
      %v370 = vmax.f32 %v338, 0.0
      %v371 = vmax.f32 %v339, 0.0
      %v372 = vmax.f32 %v340, 0.0
      %v373 = vmax.f32 %v341, 0.0
      %v374 = vmax.f32 %v342, 0.0
      %v375 = vmax.f32 %v343, 0.0
      %v376 = vmax.f32 %v344, 0.0
      %v377 = vmax.f32 %v345, 0.0
      %378 = vxpose.xlu0.b32.start [1/16] %v346, 128
      %379 = vxpose.xlu0.b32.cont [2/16] %v347, 128
      %380 = vxpose.xlu0.b32.cont [3/16] %v348, 128
      %381 = vxpose.xlu0.b32.cont [4/16] %v349, 128
      %382 = vxpose.xlu0.b32.cont [5/16] %v350, 128
      %383 = vxpose.xlu0.b32.cont [6/16] %v351, 128
      %384 = vxpose.xlu0.b32.cont [7/16] %v352, 128
      %385 = vxpose.xlu0.b32.cont [8/16] %v353, 128
      %386 = vxpose.xlu0.b32.cont [9/16] %v354, 128
      %387 = vxpose.xlu0.b32.cont [10/16] %v355, 128
      %388 = vxpose.xlu0.b32.cont [11/16] %v356, 128
      %389 = vxpose.xlu0.b32.cont [12/16] %v357, 128
      %390 = vxpose.xlu0.b32.cont [13/16] %v358, 128
      %391 = vxpose.xlu0.b32.cont [14/16] %v359, 128
      %392 = vxpose.xlu0.b32.cont [15/16] %v360, 128
      %393 = vxpose.xlu0.b32.end [16/16] %v361, 128
      %v394 = vpop.trf.xlu0
      %v395 = vpop.trf.xlu0
      %v396 = vpop.trf.xlu0
      %v397 = vpop.trf.xlu0
      %v398 = vpop.trf.xlu0
      %v399 = vpop.trf.xlu0
      %v400 = vpop.trf.xlu0
      %v401 = vpop.trf.xlu0
      %v402 = vpop.trf.xlu0
      %v403 = vpop.trf.xlu0
      %v404 = vpop.trf.xlu0
      %v405 = vpop.trf.xlu0
      %v406 = vpop.trf.xlu0
      %v407 = vpop.trf.xlu0
      %v408 = vpop.trf.xlu0
      %v409 = vpop.trf.xlu0
      %410 = vxpose.xlu0.b32.start [1/16] %v362, 128
      %411 = vxpose.xlu0.b32.cont [2/16] %v363, 128
      %412 = vxpose.xlu0.b32.cont [3/16] %v364, 128
      %413 = vxpose.xlu0.b32.cont [4/16] %v365, 128
      %414 = vxpose.xlu0.b32.cont [5/16] %v366, 128
      %415 = vxpose.xlu0.b32.cont [6/16] %v367, 128
      %416 = vxpose.xlu0.b32.cont [7/16] %v368, 128
      %417 = vxpose.xlu0.b32.cont [8/16] %v369, 128
      %418 = vxpose.xlu0.b32.cont [9/16] %v370, 128
      %419 = vxpose.xlu0.b32.cont [10/16] %v371, 128
      %420 = vxpose.xlu0.b32.cont [11/16] %v372, 128
      %421 = vxpose.xlu0.b32.cont [12/16] %v373, 128
      %422 = vxpose.xlu0.b32.cont [13/16] %v374, 128
      %423 = vxpose.xlu0.b32.cont [14/16] %v375, 128
      %424 = vxpose.xlu0.b32.cont [15/16] %v376, 128
      %425 = vxpose.xlu0.b32.end [16/16] %v377, 128
      %v426 = vpop.trf.xlu0
      %v427 = vpop.trf.xlu0
      %v428 = vpop.trf.xlu0
      %v429 = vpop.trf.xlu0
      %v430 = vpop.trf.xlu0
      %v431 = vpop.trf.xlu0
      %v432 = vpop.trf.xlu0
      %v433 = vpop.trf.xlu0
      %v434 = vpop.trf.xlu0
      %v435 = vpop.trf.xlu0
      %v436 = vpop.trf.xlu0
      %v437 = vpop.trf.xlu0
      %v438 = vpop.trf.xlu0
      %v439 = vpop.trf.xlu0
      %v440 = vpop.trf.xlu0
      %v441 = vpop.trf.xlu0
      %442 = vst [vmem:[%s208] sm:$0xff] %v394
      %443 = vst [vmem:[%s208 + $0x8] sm:$0xff] %v426
      %s444 = smul.u32 2, %s19
      %p445 = scmp.lt.s32.totalorder %s18, 1
      %s446 = scalar_select %p445, %s18, 1
      %p447 = scmp.lt.s32.totalorder %s444, 1
      %s448 = scalar_select %p447, %s444, 1
      %s449 = smul.addr %s446, 2
      %s450 = sadd.s32 %s448, %s449
      %s451 = smul.addr %s450, 8
      %s452 = scalar_lea.vmem %s3, %s451
      // Predicated region
      $region33: #{basic_conv2d.3} parent=31 // pred_check
        %p453 = pneg %p116
      $region34: #{basic_conv2d.3} parent=31 // pred_check_branch
        %455 = sbr.rel (%p453) target = $region36
      $region35: #{basic_conv2d.3} parent=31 // pred_region
        %s456 = smul.u32 2, %s19
      $region36: #{basic_conv2d.3} parent=31 // pred_fallthru
        _
    $region32: #{basic_conv2d.3} parent=5 // pred_fallthru
      _
    %p457 = scmp.le.s32.totalorder 2, %s9
    // Predicated region
    $region37: #{basic_conv2d.3} parent=5 // pred_check
      %p458 = pneg %p457
    $region38: #{basic_conv2d.3} parent=5 // pred_check_branch
      %460 = sbr.rel (%p458) target = $region40
    $region39: #{basic_conv2d.3} parent=5 // pred_region
      %s461 = ssub.s32 %s9, 2
      // Predicated region
      $region41: #{basic_conv2d.3} parent=39 // pred_check
        %p462 = pneg %p122
      $region42: #{basic_conv2d.3} parent=39 // pred_check_branch
        %464 = sbr.rel (%p462) target = $region44
      $region43: #{basic_conv2d.3} parent=39 // pred_region
        %s465 = smul.u32 2, %s21
        %p466 = scmp.lt.s32.totalorder %s20, 1
        %s467 = scalar_select %p466, %s20, 1
        %p468 = scmp.lt.s32.totalorder %s465, 1
        %s469 = scalar_select %p468, %s465, 1
        %s470 = smul.addr %s467, 2
        %s471 = sadd.s32 %s469, %s470
        %s472 = smul.addr %s471, 8
        %s473 = scalar_lea.vmem %s3, %s472
      $region44: #{basic_conv2d.3} parent=39 // pred_fallthru
        _
    $region40: #{basic_conv2d.3} parent=5 // pred_fallthru
      _
  $region6: #{basic_conv2d.3} parent=0 // loop_footer
    %s13 = sadd.s32 1, %s9
  $region7: #{basic_conv2d.3} parent=0 // loop_footer_branch
    %8 = sbr.rel target = $region3
  $region8: #{basic_conv2d.3} parent=0 // loop_exit
    _

// kernel: basic_conv2d.2
$region0: #{basic_conv2d.2}
  #allocation0 [shape = 'u32[]', space=smem, size = 0x4, offset = 0x4, fixed_abs, tag = 'smem constant byte address 0x4 - core index']
  #allocation1 [shape = 'u32[72,128]{1,0:T(1,128)}', space=vmem, size = 0x9000, scoped, tag = 'internal scratch']
  %s0 = inlined_call_operand.vmem [shape: bf16[2,18,72], index: 0, kind: input, shape index: {}]
  %s1 = inlined_call_operand.vmem [shape: bf16[36,128], index: 1, kind: input, shape index: {}]
  %s2 = inlined_call_operand.vmem [shape: bf16[2,256,128], index: 2, kind: output, shape index: {0}]
  %s3 = inlined_call_operand.vmem [shape: f32[2,2,2,128], index: 3, kind: output, shape index: {1}]
  %4 = xla_tuple %s2, %s3
  %s5 = sld [smem:[#allocation0]]
  $region49: #{basic_conv2d.2} parent=0
    _
  %s7 = ssub.s32 1, %s5
  %s8 = scalar_select 0, %s7, %s5
  loop: start=0, step=1, limit=6
  $region2: #{basic_conv2d.2} parent=0 // loop_pre_header
    _
  $region3: #{basic_conv2d.2} parent=0 // loop_header
    %s10 = sphi 0, %s14
    %p11 = scmp.ge.s32.totalorder %s10, 6
    %s17 = sphi 0, %s29
    %s18 = sphi 0, %s25
    %s19 = sphi 0, %s17
    %s20 = sphi 0, %s18
    %s21 = sphi 0, %s19
    %s22 = sphi 0, %s20
    %s32 = sphi 0, %s34
    %s35 = sphi 0, %s32
    %s36 = sphi 0, %s35
    %s52 = sphi 0, %s36
    %s56 = sphi 0, %s56
    %s58 = sphi 0, %s56
    %s59 = sphi 0, %s58
    %s73 = sphi 0, %s59
    %s81 = sphi 0, %s83
    %s84 = sphi 0, %s81
    %s85 = sphi 0, %s84
    %s101 = sphi 0, %s85
    %s109 = sphi 0, %s111
    %s112 = sphi 0, %s109
    %s113 = sphi 0, %s112
    %s129 = sphi 0, %s113
  $region4: #{basic_conv2d.2} parent=0 // loop_header_branch
    %13 = sbr.rel (%p11) target = $region8
  $region5: #{basic_conv2d.2} parent=0 // loop_body
    %s15 = ssub.s32 %s10, 1
    %s16 = ssub.s32 %s10, 2
    %s23 = sadd.s32 1, %s18
    %p24 = scmp.ge.s32.totalorder %s23, 2
    %s25 = scalar_select %p24, 0, %s23
    %s26 = sadd.s32 1, %s17
    %s27 = scalar_select %p24, %s26, %s17
    %p28 = scmp.ge.s32.totalorder %s27, 2
    %s29 = scalar_select %p28, 0, %s27
    %s30 = ssub.s32 %s17, %s29
    %p31 = scmp.eq.s32.totalorder %s30, 0
    %s33 = sadd.s32 %s32, 1
    %s34 = scalar_select %p31, %s32, %s33
    %p37 = pneg %p31
    %p38 = scmp.eq.s32.totalorder %s10, 3
    %p39 = por %p37, %p38
    %p40 = scmp.ne.s32.totalorder %s32, %s35
    %p41 = scmp.eq.s32.totalorder %s10, 0
    %p42 = por %p40, %p41
    %p43 = scmp.ne.s32.totalorder %s32, %s35
    %p44 = scmp.eq.s32.totalorder %s15, 3
    %p45 = por %p43, %p44
    %p46 = scmp.ne.s32.totalorder %s35, %s36
    %p47 = scmp.eq.s32.totalorder %s15, 0
    %p48 = por %p46, %p47
    %p49 = scmp.ne.s32.totalorder %s35, %s36
    %p50 = scmp.eq.s32.totalorder %s16, 3
    %p51 = por %p49, %p50
    %p53 = scmp.ne.s32.totalorder %s36, %s52
    %p54 = scmp.eq.s32.totalorder %s16, 0
    %p55 = por %p53, %p54
    %s57 = sadd.s32 %s56, 1
    %p60 = scmp.eq.s32.totalorder %s10, 3
    %p61 = scmp.ne.s32.totalorder %s56, %s58
    %p62 = scmp.eq.s32.totalorder %s10, 0
    %p63 = por %p61, %p62
    %p64 = scmp.ne.s32.totalorder %s56, %s58
    %p65 = scmp.eq.s32.totalorder %s15, 3
    %p66 = por %p64, %p65
    %p67 = scmp.ne.s32.totalorder %s58, %s59
    %p68 = scmp.eq.s32.totalorder %s15, 0
    %p69 = por %p67, %p68
    %p70 = scmp.ne.s32.totalorder %s58, %s59
    %p71 = scmp.eq.s32.totalorder %s16, 3
    %p72 = por %p70, %p71
    %p74 = scmp.ne.s32.totalorder %s59, %s73
    %p75 = scmp.eq.s32.totalorder %s16, 0
    %p76 = por %p74, %p75
    %s77 = ssub.s32 %s17, %s29
    %s78 = ssub.s32 %s18, %s25
    %s79 = sor.u32 %s77, %s78
    %p80 = scmp.eq.s32.totalorder %s79, 0
    %s82 = sadd.s32 %s81, 1
    %s83 = scalar_select %p80, %s81, %s82
    %p86 = pneg %p80
    %p87 = scmp.eq.s32.totalorder %s10, 3
    %p88 = por %p86, %p87
    %p89 = scmp.ne.s32.totalorder %s81, %s84
    %p90 = scmp.eq.s32.totalorder %s10, 0
    %p91 = por %p89, %p90
    %p92 = scmp.ne.s32.totalorder %s81, %s84
    %p93 = scmp.eq.s32.totalorder %s15, 3
    %p94 = por %p92, %p93
    %p95 = scmp.ne.s32.totalorder %s84, %s85
    %p96 = scmp.eq.s32.totalorder %s15, 0
    %p97 = por %p95, %p96
    %p98 = scmp.ne.s32.totalorder %s84, %s85
    %p99 = scmp.eq.s32.totalorder %s16, 3
    %p100 = por %p98, %p99
    %p102 = scmp.ne.s32.totalorder %s85, %s101
    %p103 = scmp.eq.s32.totalorder %s16, 0
    %p104 = por %p102, %p103
    %s105 = ssub.s32 %s17, %s29
    %s106 = ssub.s32 %s18, %s25
    %s107 = sor.u32 %s105, %s106
    %p108 = scmp.eq.s32.totalorder %s107, 0
    %s110 = sadd.s32 %s109, 1
    %s111 = scalar_select %p108, %s109, %s110
    %p114 = pneg %p108
    %p115 = scmp.eq.s32.totalorder %s10, 3
    %p116 = por %p114, %p115
    %p117 = scmp.ne.s32.totalorder %s109, %s112
    %p118 = scmp.eq.s32.totalorder %s10, 0
    %p119 = por %p117, %p118
    %p120 = scmp.ne.s32.totalorder %s109, %s112
    %p121 = scmp.eq.s32.totalorder %s15, 3
    %p122 = por %p120, %p121
    %p123 = scmp.ne.s32.totalorder %s112, %s113
    %p124 = scmp.eq.s32.totalorder %s15, 0
    %p125 = por %p123, %p124
    %p126 = scmp.ne.s32.totalorder %s112, %s113
    %p127 = scmp.eq.s32.totalorder %s16, 3
    %p128 = por %p126, %p127
    %p130 = scmp.ne.s32.totalorder %s113, %s129
    %p131 = scmp.eq.s32.totalorder %s16, 0
    %p132 = por %p130, %p131
    %p133 = scmp.le.s32.totalorder 1, %s10
    %p134 = scmp.lt.s32.totalorder %s10, 5
    %p135 = pnand %p133, %p134
    %p136 = pneg %p135
    // Predicated region
    $region9: #{basic_conv2d.2} parent=5 // pred_check
      _
    $region10: #{basic_conv2d.2} parent=5 // pred_check_branch
      %138 = sbr.rel (%p135) target = $region12
    $region11: #{basic_conv2d.2} parent=5 // pred_region
      %s139 = ssub.s32 %s10, 1
      // Predicated region
      $region13: #{basic_conv2d.2} parent=11 // pred_check
        %p140 = pneg %p69
      $region14: #{basic_conv2d.2} parent=11 // pred_check_branch
        %142 = sbr.rel (%p140) target = $region16
      $region15: #{basic_conv2d.2} parent=11 // pred_region
        _
      $region16: #{basic_conv2d.2} parent=11 // pred_fallthru
        _
    $region12: #{basic_conv2d.2} parent=5 // pred_fallthru
      _
    %p143 = scmp.lt.s32.totalorder %s10, 4
    // Predicated region
    $region17: #{basic_conv2d.2} parent=5 // pred_check
      %p144 = pneg %p143
    $region18: #{basic_conv2d.2} parent=5 // pred_check_branch
      %146 = sbr.rel (%p144) target = $region20
    $region19: #{basic_conv2d.2} parent=5 // pred_region
      // Predicated region
      $region21: #{basic_conv2d.2} parent=19 // pred_check
        %p147 = pneg %p42
      $region22: #{basic_conv2d.2} parent=19 // pred_check_branch
        %149 = sbr.rel (%p147) target = $region24
      $region23: #{basic_conv2d.2} parent=19 // pred_region
        %p150 = scmp.lt.s32.totalorder %s17, 1
        %s151 = scalar_select %p150, %s17, 1
        %s152 = smul.addr %s151, 3
        %s153 = smul.addr %s152, 4
        %s154 = scalar_lea.vmem %s0, %s153
      $region24: #{basic_conv2d.2} parent=19 // pred_fallthru
        _
    $region20: #{basic_conv2d.2} parent=5 // pred_fallthru
      _
    %p155 = scmp.le.s32.totalorder 1, %s10
    %p156 = scmp.lt.s32.totalorder %s10, 5
    %p157 = pnand %p155, %p156
    %p158 = pneg %p157
    // Predicated region
    $region25: #{basic_conv2d.2} parent=5 // pred_check
      _
    $region26: #{basic_conv2d.2} parent=5 // pred_check_branch
      %160 = sbr.rel (%p157) target = $region28
    $region27: #{basic_conv2d.2} parent=5 // pred_region
      %s161 = ssub.s32 %s10, 1
      %p162 = scmp.lt.s32.totalorder %s19, 1
      %s163 = scalar_select %p162, %s19, 1
      %s164 = smul.addr %s163, 3
      %s165 = smul.addr %s164, 4
      %s166 = scalar_lea.vmem %s0, %s165
      %p167 = pneg %p48
      %p168 = pneg %p45
      %p169 = pneg %p69
      %p170 = pneg %p66
      %p171 = pneg %p97
      %p172 = pneg %p94
      %s173 = smul.u32 16, %s20
      %p174 = scmp.lt.s32.totalorder %s19, 1
      %s175 = scalar_select %p174, %s19, 1
      %p176 = scmp.lt.s32.totalorder %s173, 31
      %s177 = scalar_select %p176, %s173, 31
      %s178 = smul.addr %s175, 32
      %s179 = sadd.s32 %s177, %s178
      %s180 = smul.addr %s179, 4
      %s181 = scalar_lea.vmem %s2, %s180
      %p182 = pneg %p125
      %p183 = pneg %p122
      %p184 = scmp.lt.s32.totalorder %s19, 1
      %s185 = scalar_select %p184, %s19, 1
      %p186 = scmp.lt.s32.totalorder %s20, 1
      %s187 = scalar_select %p186, %s20, 1
      %s188 = smul.addr %s185, 2
      %s189 = sadd.s32 %s187, %s188
      %s190 = smul.addr %s189, 2
      %s191 = scalar_lea.vmem %s3, %s190
      %p192 = scmp.lt.s32.totalorder %s19, 1
      %s193 = scalar_select %p192, %s19, 1
      %s194 = smul.addr %s193, 3
      %s195 = smul.addr %s194, 4
      %s196 = scalar_lea.vmem %s0, %s195
      %s197 = smul.u32 16, %s20
      %p198 = scmp.lt.s32.totalorder %s19, 1
      %s199 = scalar_select %p198, %s19, 1
      %p200 = scmp.lt.s32.totalorder %s197, 31
      %s201 = scalar_select %p200, %s197, 31
      %s202 = smul.addr %s199, 32
      %s203 = sadd.s32 %s201, %s202
      %s204 = smul.addr %s203, 4
      %s205 = scalar_lea.vmem %s2, %s204
      %s206 = smul.u32 16, %s20
      %p207 = scmp.lt.s32.totalorder %s19, 1
      %s208 = scalar_select %p207, %s19, 1
      %p209 = scmp.lt.s32.totalorder %s20, 1
      %s210 = scalar_select %p209, %s20, 1
      %s211 = smul.addr %s208, 2
      %s212 = sadd.s32 %s210, %s211
      %s213 = smul.addr %s212, 2
      %s214 = scalar_lea.vmem %s3, %s213
      %s216 = smul.u32 %s20, 8
      %s217 = sshra.s32 %s216, 3
      %s218 = sand.u32 %s216, 7
      %s219 = smul.addr %s217, 4
      %s220 = scalar_lea.vmem %s196, %s219
      %v221 = vld [vmem:[%s220] sm:$0xf]
      %v222 = vld [vmem:[%s220 + $0x4] sm:$0x1]
      %224 = vrot.lane.b32.xlu0 %v221, 124
      %v225 = vpop.permute.xlu0 %224
      %227 = vrot.lane.b32.xlu0 %v221, 120
      %v228 = vpop.permute.xlu0 %227
      %230 = vrot.lane.b32.xlu0 %v221, 116
      %v231 = vpop.permute.xlu0 %230
      %233 = vrot.lane.b32.xlu0 %v221, 112
      %v234 = vpop.permute.xlu0 %233
      %236 = vrot.lane.b32.xlu0 %v221, 108
      %v237 = vpop.permute.xlu0 %236
      %239 = vrot.lane.b32.xlu0 %v221, 104
      %v240 = vpop.permute.xlu0 %239
      %242 = vrot.lane.b32.xlu0 %v221, 100
      %v243 = vpop.permute.xlu0 %242
      %245 = vrot.lane.b32.xlu0 %v221, 96
      %v246 = vpop.permute.xlu0 %245
      %248 = vrot.lane.b32.xlu0 %v221, 92
      %v249 = vpop.permute.xlu0 %248
      %251 = vrot.lane.b32.xlu0 %v221, 88
      %v252 = vpop.permute.xlu0 %251
      %254 = vrot.lane.b32.xlu0 %v221, 84
      %v255 = vpop.permute.xlu0 %254
      %257 = vrot.lane.b32.xlu0 %v221, 80
      %v258 = vpop.permute.xlu0 %257
      %260 = vrot.lane.b32.xlu0 %v221, 76
      %v261 = vpop.permute.xlu0 %260
      %263 = vrot.lane.b32.xlu0 %v221, 72
      %v264 = vpop.permute.xlu0 %263
      %266 = vrot.lane.b32.xlu0 %v221, 68
      %v267 = vpop.permute.xlu0 %266
      %v269 = vrot.slane %v234, 4
      %vm270 = vcmask 1047556
      %v271 = vsel %vm270, %v269, %v221
      %v273 = vunpack.c.l.s4 1983009808
      %v274 = vunpack.c.0.s8 %v273
      %v275 = vperm.slane %v271, %v274
      %v276 = vrot.slane %v240, 4
      %v277 = vsel %vm270, %v276, %v228
      %v279 = vunpack.c.l.s4 1983009808
      %v280 = vunpack.c.0.s8 %v279
      %v281 = vperm.slane %v277, %v280
      %v282 = vrot.slane %v281, 4
      %v283 = vsel %vm270, %v282, %v275
      %v284 = vrot.slane %v275, 4
      %v285 = vsel %vm270, %v281, %v284
      %v287 = vunpack.c.l.s4 1934713408
      %v288 = vunpack.c.0.s8 %v287
      %v289 = vperm.slane %v283, %v288
      %v291 = vunpack.c.l.s4 1934713408
      %v292 = vunpack.c.0.s8 %v291
      %v293 = vperm.slane %v285, %v292
      %v294 = vrot.slane %v289, 4
      %v295 = vsel %vm270, 0, %v294
      %v296 = vrot.slane %v293, 4
      %v297 = vsel %vm270, 0, %v296
      %v298 = vrot.slane %v237, 4
      %v299 = vsel %vm270, %v298, %v225
      %v301 = vunpack.c.l.s4 1983009808
      %v302 = vunpack.c.0.s8 %v301
      %v303 = vperm.slane %v299, %v302
      %v304 = vrot.slane %v243, 4
      %v305 = vsel %vm270, %v304, %v231
      %v307 = vunpack.c.l.s4 1983009808
      %v308 = vunpack.c.0.s8 %v307
      %v309 = vperm.slane %v305, %v308
      %v310 = vrot.slane %v309, 4
      %v311 = vsel %vm270, %v310, %v303
      %v312 = vrot.slane %v303, 4
      %v313 = vsel %vm270, %v309, %v312
      %v315 = vunpack.c.l.s4 1934713408
      %v316 = vunpack.c.0.s8 %v315
      %v317 = vperm.slane %v311, %v316
      %v319 = vunpack.c.l.s4 1934713408
      %v320 = vunpack.c.0.s8 %v319
      %v321 = vperm.slane %v313, %v320
      %v322 = vrot.slane %v317, 4
      %v323 = vsel %vm270, 0, %v322
      %v324 = vrot.slane %v321, 4
      %v325 = vsel %vm270, 0, %v324
      %v326 = vrot.slane %v258, 4
      %v327 = vsel %vm270, %v326, %v246
      %v329 = vunpack.c.l.s4 1983009808
      %v330 = vunpack.c.0.s8 %v329
      %v331 = vperm.slane %v327, %v330
      %v332 = vrot.slane %v264, 4
      %v333 = vsel %vm270, %v332, %v252
      %v335 = vunpack.c.l.s4 1983009808
      %v336 = vunpack.c.0.s8 %v335
      %v337 = vperm.slane %v333, %v336
      %v338 = vrot.slane %v337, 4
      %v339 = vsel %vm270, %v338, %v331
      %v340 = vrot.slane %v331, 4
      %v341 = vsel %vm270, %v337, %v340
      %v343 = vunpack.c.l.s4 1934713408
      %v344 = vunpack.c.0.s8 %v343
      %v345 = vperm.slane %v339, %v344
      %v347 = vunpack.c.l.s4 1934713408
      %v348 = vunpack.c.0.s8 %v347
      %v349 = vperm.slane %v341, %v348
      %v350 = vrot.slane %v345, 4
      %v351 = vsel %vm270, 0, %v350
      %v352 = vrot.slane %v349, 4
      %v353 = vsel %vm270, 0, %v352
      %v354 = vrot.slane %v261, 4
      %v355 = vsel %vm270, %v354, %v249
      %v357 = vunpack.c.l.s4 1983009808
      %v358 = vunpack.c.0.s8 %v357
      %v359 = vperm.slane %v355, %v358
      %v360 = vrot.slane %v267, 4
      %v361 = vsel %vm270, %v360, %v255
      %v363 = vunpack.c.l.s4 1983009808
      %v364 = vunpack.c.0.s8 %v363
      %v365 = vperm.slane %v361, %v364
      %v366 = vrot.slane %v365, 4
      %v367 = vsel %vm270, %v366, %v359
      %v368 = vrot.slane %v359, 4
      %v369 = vsel %vm270, %v365, %v368
      %v371 = vunpack.c.l.s4 1934713408
      %v372 = vunpack.c.0.s8 %v371
      %v373 = vperm.slane %v367, %v372
      %v375 = vunpack.c.l.s4 1934713408
      %v376 = vunpack.c.0.s8 %v375
      %v377 = vperm.slane %v369, %v376
      %v378 = vrot.slane %v373, 4
      %v379 = vsel %vm270, 0, %v378
      %v380 = vrot.slane %v377, 4
      %v381 = vsel %vm270, 0, %v380
      %v384 = vpack.i.b16 %v317, %v289
      %v385 = vshrl.u32 %v289, 16
      %v386 = vshrl.u32 %v317, 16
      %v387 = vpack.i.b16 %v386, %v385
      %v390 = vpack.i.b16 %v323, %v295
      %v391 = vshrl.u32 %v295, 16
      %v392 = vshrl.u32 %v323, 16
      %v393 = vpack.i.b16 %v392, %v391
      %v396 = vpack.i.b16 %v321, %v293
      %v397 = vshrl.u32 %v293, 16
      %v398 = vshrl.u32 %v321, 16
      %v399 = vpack.i.b16 %v398, %v397
      %v402 = vpack.i.b16 %v325, %v297
      %v403 = vshrl.u32 %v297, 16
      %v404 = vshrl.u32 %v325, 16
      %v405 = vpack.i.b16 %v404, %v403
      %v408 = vpack.i.b16 %v373, %v345
      %v409 = vshrl.u32 %v345, 16
      %v410 = vshrl.u32 %v373, 16
      %v411 = vpack.i.b16 %v410, %v409
      %v414 = vpack.i.b16 %v379, %v351
      %v415 = vshrl.u32 %v351, 16
      %v416 = vshrl.u32 %v379, 16
      %v417 = vpack.i.b16 %v416, %v415
      %v420 = vpack.i.b16 %v377, %v349
      %v421 = vshrl.u32 %v349, 16
      %v422 = vshrl.u32 %v377, 16
      %v423 = vpack.i.b16 %v422, %v421
      %v426 = vpack.i.b16 %v381, %v353
      %v427 = vshrl.u32 %v353, 16
      %v428 = vshrl.u32 %v381, 16
      %v429 = vpack.i.b16 %v428, %v427
      %430 = vrot.lane.b32.xlu0 %v225, 124
      %v431 = vpop.permute.xlu0 %430
      %432 = vrot.lane.b32.xlu0 %v228, 124
      %v433 = vpop.permute.xlu0 %432
      %434 = vrot.lane.b32.xlu0 %v231, 124
      %v435 = vpop.permute.xlu0 %434
      %436 = vrot.lane.b32.xlu0 %v234, 124
      %v437 = vpop.permute.xlu0 %436
      %438 = vrot.lane.b32.xlu0 %v237, 124
      %v439 = vpop.permute.xlu0 %438
      %440 = vrot.lane.b32.xlu0 %v240, 124
      %v441 = vpop.permute.xlu0 %440
      %442 = vrot.lane.b32.xlu0 %v243, 124
      %v443 = vpop.permute.xlu0 %442
      %444 = vrot.lane.b32.xlu0 %v246, 124
      %v445 = vpop.permute.xlu0 %444
      %446 = vrot.lane.b32.xlu0 %v249, 124
      %v447 = vpop.permute.xlu0 %446
      %448 = vrot.lane.b32.xlu0 %v252, 124
      %v449 = vpop.permute.xlu0 %448
      %450 = vrot.lane.b32.xlu0 %v255, 124
      %v451 = vpop.permute.xlu0 %450
      %452 = vrot.lane.b32.xlu0 %v258, 124
      %v453 = vpop.permute.xlu0 %452
      %454 = vrot.lane.b32.xlu0 %v261, 124
      %v455 = vpop.permute.xlu0 %454
      %456 = vrot.lane.b32.xlu0 %v264, 124
      %v457 = vpop.permute.xlu0 %456
      %458 = vrot.lane.b32.xlu0 %v267, 124
      %v459 = vpop.permute.xlu0 %458
      %v475 = vrot.slane %v437, 4
      %v476 = vsel %vm270, %v475, %v225
      %v478 = vunpack.c.l.s4 1983009808
      %v479 = vunpack.c.0.s8 %v478
      %v480 = vperm.slane %v476, %v479
      %v481 = vrot.slane %v441, 4
      %v482 = vsel %vm270, %v481, %v433
      %v484 = vunpack.c.l.s4 1983009808
      %v485 = vunpack.c.0.s8 %v484
      %v486 = vperm.slane %v482, %v485
      %v487 = vrot.slane %v486, 4
      %v488 = vsel %vm270, %v487, %v480
      %v489 = vrot.slane %v480, 4
      %v490 = vsel %vm270, %v486, %v489
      %v492 = vunpack.c.l.s4 1934713408
      %v493 = vunpack.c.0.s8 %v492
      %v494 = vperm.slane %v488, %v493
      %v496 = vunpack.c.l.s4 1934713408
      %v497 = vunpack.c.0.s8 %v496
      %v498 = vperm.slane %v490, %v497
      %v499 = vrot.slane %v494, 4
      %v500 = vsel %vm270, 0, %v499
      %v501 = vrot.slane %v498, 4
      %v502 = vsel %vm270, 0, %v501
      %v503 = vrot.slane %v439, 4
      %v504 = vsel %vm270, %v503, %v431
      %v506 = vunpack.c.l.s4 1983009808
      %v507 = vunpack.c.0.s8 %v506
      %v508 = vperm.slane %v504, %v507
      %v509 = vrot.slane %v443, 4
      %v510 = vsel %vm270, %v509, %v435
      %v512 = vunpack.c.l.s4 1983009808
      %v513 = vunpack.c.0.s8 %v512
      %v514 = vperm.slane %v510, %v513
      %v515 = vrot.slane %v514, 4
      %v516 = vsel %vm270, %v515, %v508
      %v517 = vrot.slane %v508, 4
      %v518 = vsel %vm270, %v514, %v517
      %v520 = vunpack.c.l.s4 1934713408
      %v521 = vunpack.c.0.s8 %v520
      %v522 = vperm.slane %v516, %v521
      %v524 = vunpack.c.l.s4 1934713408
      %v525 = vunpack.c.0.s8 %v524
      %v526 = vperm.slane %v518, %v525
      %v527 = vrot.slane %v522, 4
      %v528 = vsel %vm270, 0, %v527
      %v529 = vrot.slane %v526, 4
      %v530 = vsel %vm270, 0, %v529
      %v531 = vrot.slane %v453, 4
      %v532 = vsel %vm270, %v531, %v445
      %v534 = vunpack.c.l.s4 1983009808
      %v535 = vunpack.c.0.s8 %v534
      %v536 = vperm.slane %v532, %v535
      %v537 = vrot.slane %v457, 4
      %v538 = vsel %vm270, %v537, %v449
      %v540 = vunpack.c.l.s4 1983009808
      %v541 = vunpack.c.0.s8 %v540
      %v542 = vperm.slane %v538, %v541
      %v543 = vrot.slane %v542, 4
      %v544 = vsel %vm270, %v543, %v536
      %v545 = vrot.slane %v536, 4
      %v546 = vsel %vm270, %v542, %v545
      %v548 = vunpack.c.l.s4 1934713408
      %v549 = vunpack.c.0.s8 %v548
      %v550 = vperm.slane %v544, %v549
      %v552 = vunpack.c.l.s4 1934713408
      %v553 = vunpack.c.0.s8 %v552
      %v554 = vperm.slane %v546, %v553
      %v555 = vrot.slane %v550, 4
      %v556 = vsel %vm270, 0, %v555
      %v557 = vrot.slane %v554, 4
      %v558 = vsel %vm270, 0, %v557
      %v559 = vrot.slane %v455, 4
      %v560 = vsel %vm270, %v559, %v447
      %v562 = vunpack.c.l.s4 1983009808
      %v563 = vunpack.c.0.s8 %v562
      %v564 = vperm.slane %v560, %v563
      %v565 = vrot.slane %v459, 4
      %v566 = vsel %vm270, %v565, %v451
      %v568 = vunpack.c.l.s4 1983009808
      %v569 = vunpack.c.0.s8 %v568
      %v570 = vperm.slane %v566, %v569
      %v571 = vrot.slane %v570, 4
      %v572 = vsel %vm270, %v571, %v564
      %v573 = vrot.slane %v564, 4
      %v574 = vsel %vm270, %v570, %v573
      %v576 = vunpack.c.l.s4 1934713408
      %v577 = vunpack.c.0.s8 %v576
      %v578 = vperm.slane %v572, %v577
      %v580 = vunpack.c.l.s4 1934713408
      %v581 = vunpack.c.0.s8 %v580
      %v582 = vperm.slane %v574, %v581
      %v583 = vrot.slane %v578, 4
      %v584 = vsel %vm270, 0, %v583
      %v585 = vrot.slane %v582, 4
      %v586 = vsel %vm270, 0, %v585
      %v589 = vpack.i.b16 %v522, %v494
      %v590 = vshrl.u32 %v494, 16
      %v591 = vshrl.u32 %v522, 16
      %v592 = vpack.i.b16 %v591, %v590
      %v595 = vpack.i.b16 %v528, %v500
      %v596 = vshrl.u32 %v500, 16
      %v597 = vshrl.u32 %v528, 16
      %v598 = vpack.i.b16 %v597, %v596
      %v601 = vpack.i.b16 %v526, %v498
      %v602 = vshrl.u32 %v498, 16
      %v603 = vshrl.u32 %v526, 16
      %v604 = vpack.i.b16 %v603, %v602
      %v607 = vpack.i.b16 %v530, %v502
      %v608 = vshrl.u32 %v502, 16
      %v609 = vshrl.u32 %v530, 16
      %v610 = vpack.i.b16 %v609, %v608
      %v613 = vpack.i.b16 %v578, %v550
      %v614 = vshrl.u32 %v550, 16
      %v615 = vshrl.u32 %v578, 16
      %v616 = vpack.i.b16 %v615, %v614
      %v619 = vpack.i.b16 %v584, %v556
      %v620 = vshrl.u32 %v556, 16
      %v621 = vshrl.u32 %v584, 16
      %v622 = vpack.i.b16 %v621, %v620
      %v625 = vpack.i.b16 %v582, %v554
      %v626 = vshrl.u32 %v554, 16
      %v627 = vshrl.u32 %v582, 16
      %v628 = vpack.i.b16 %v627, %v626
      %v631 = vpack.i.b16 %v586, %v558
      %v632 = vshrl.u32 %v558, 16
      %v633 = vshrl.u32 %v586, 16
      %v634 = vpack.i.b16 %v633, %v632
      %635 = vrot.lane.b32.xlu0 %v225, 120
      %v636 = vpop.permute.xlu0 %635
      %637 = vrot.lane.b32.xlu0 %v228, 120
      %v638 = vpop.permute.xlu0 %637
      %639 = vrot.lane.b32.xlu0 %v231, 120
      %v640 = vpop.permute.xlu0 %639
      %641 = vrot.lane.b32.xlu0 %v234, 120
      %v642 = vpop.permute.xlu0 %641
      %643 = vrot.lane.b32.xlu0 %v237, 120
      %v644 = vpop.permute.xlu0 %643
      %645 = vrot.lane.b32.xlu0 %v240, 120
      %v646 = vpop.permute.xlu0 %645
      %647 = vrot.lane.b32.xlu0 %v243, 120
      %v648 = vpop.permute.xlu0 %647
      %649 = vrot.lane.b32.xlu0 %v246, 120
      %v650 = vpop.permute.xlu0 %649
      %651 = vrot.lane.b32.xlu0 %v249, 120
      %v652 = vpop.permute.xlu0 %651
      %653 = vrot.lane.b32.xlu0 %v252, 120
      %v654 = vpop.permute.xlu0 %653
      %655 = vrot.lane.b32.xlu0 %v255, 120
      %v656 = vpop.permute.xlu0 %655
      %657 = vrot.lane.b32.xlu0 %v258, 120
      %v658 = vpop.permute.xlu0 %657
      %659 = vrot.lane.b32.xlu0 %v261, 120
      %v660 = vpop.permute.xlu0 %659
      %661 = vrot.lane.b32.xlu0 %v264, 120
      %v662 = vpop.permute.xlu0 %661
      %663 = vrot.lane.b32.xlu0 %v267, 120
      %v664 = vpop.permute.xlu0 %663
      %v680 = vrot.slane %v642, 4
      %v681 = vsel %vm270, %v680, %v228
      %v683 = vunpack.c.l.s4 1983009808
      %v684 = vunpack.c.0.s8 %v683
      %v685 = vperm.slane %v681, %v684
      %v686 = vrot.slane %v646, 4
      %v687 = vsel %vm270, %v686, %v638
      %v689 = vunpack.c.l.s4 1983009808
      %v690 = vunpack.c.0.s8 %v689
      %v691 = vperm.slane %v687, %v690
      %v692 = vrot.slane %v691, 4
      %v693 = vsel %vm270, %v692, %v685
      %v694 = vrot.slane %v685, 4
      %v695 = vsel %vm270, %v691, %v694
      %v697 = vunpack.c.l.s4 1934713408
      %v698 = vunpack.c.0.s8 %v697
      %v699 = vperm.slane %v693, %v698
      %v701 = vunpack.c.l.s4 1934713408
      %v702 = vunpack.c.0.s8 %v701
      %v703 = vperm.slane %v695, %v702
      %v704 = vrot.slane %v699, 4
      %v705 = vsel %vm270, 0, %v704
      %v706 = vrot.slane %v703, 4
      %v707 = vsel %vm270, 0, %v706
      %v708 = vrot.slane %v644, 4
      %v709 = vsel %vm270, %v708, %v636
      %v711 = vunpack.c.l.s4 1983009808
      %v712 = vunpack.c.0.s8 %v711
      %v713 = vperm.slane %v709, %v712
      %v714 = vrot.slane %v648, 4
      %v715 = vsel %vm270, %v714, %v640
      %v717 = vunpack.c.l.s4 1983009808
      %v718 = vunpack.c.0.s8 %v717
      %v719 = vperm.slane %v715, %v718
      %v720 = vrot.slane %v719, 4
      %v721 = vsel %vm270, %v720, %v713
      %v722 = vrot.slane %v713, 4
      %v723 = vsel %vm270, %v719, %v722
      %v725 = vunpack.c.l.s4 1934713408
      %v726 = vunpack.c.0.s8 %v725
      %v727 = vperm.slane %v721, %v726
      %v729 = vunpack.c.l.s4 1934713408
      %v730 = vunpack.c.0.s8 %v729
      %v731 = vperm.slane %v723, %v730
      %v732 = vrot.slane %v727, 4
      %v733 = vsel %vm270, 0, %v732
      %v734 = vrot.slane %v731, 4
      %v735 = vsel %vm270, 0, %v734
      %v736 = vrot.slane %v658, 4
      %v737 = vsel %vm270, %v736, %v650
      %v739 = vunpack.c.l.s4 1983009808
      %v740 = vunpack.c.0.s8 %v739
      %v741 = vperm.slane %v737, %v740
      %v742 = vrot.slane %v662, 4
      %v743 = vsel %vm270, %v742, %v654
      %v745 = vunpack.c.l.s4 1983009808
      %v746 = vunpack.c.0.s8 %v745
      %v747 = vperm.slane %v743, %v746
      %v748 = vrot.slane %v747, 4
      %v749 = vsel %vm270, %v748, %v741
      %v750 = vrot.slane %v741, 4
      %v751 = vsel %vm270, %v747, %v750
      %v753 = vunpack.c.l.s4 1934713408
      %v754 = vunpack.c.0.s8 %v753
      %v755 = vperm.slane %v749, %v754
      %v757 = vunpack.c.l.s4 1934713408
      %v758 = vunpack.c.0.s8 %v757
      %v759 = vperm.slane %v751, %v758
      %v760 = vrot.slane %v755, 4
      %v761 = vsel %vm270, 0, %v760
      %v762 = vrot.slane %v759, 4
      %v763 = vsel %vm270, 0, %v762
      %v764 = vrot.slane %v660, 4
      %v765 = vsel %vm270, %v764, %v652
      %v767 = vunpack.c.l.s4 1983009808
      %v768 = vunpack.c.0.s8 %v767
      %v769 = vperm.slane %v765, %v768
      %v770 = vrot.slane %v664, 4
      %v771 = vsel %vm270, %v770, %v656
      %v773 = vunpack.c.l.s4 1983009808
      %v774 = vunpack.c.0.s8 %v773
      %v775 = vperm.slane %v771, %v774
      %v776 = vrot.slane %v775, 4
      %v777 = vsel %vm270, %v776, %v769
      %v778 = vrot.slane %v769, 4
      %v779 = vsel %vm270, %v775, %v778
      %v781 = vunpack.c.l.s4 1934713408
      %v782 = vunpack.c.0.s8 %v781
      %v783 = vperm.slane %v777, %v782
      %v785 = vunpack.c.l.s4 1934713408
      %v786 = vunpack.c.0.s8 %v785
      %v787 = vperm.slane %v779, %v786
      %v788 = vrot.slane %v783, 4
      %v789 = vsel %vm270, 0, %v788
      %v790 = vrot.slane %v787, 4
      %v791 = vsel %vm270, 0, %v790
      %v794 = vpack.i.b16 %v727, %v699
      %v795 = vshrl.u32 %v699, 16
      %v796 = vshrl.u32 %v727, 16
      %v797 = vpack.i.b16 %v796, %v795
      %v800 = vpack.i.b16 %v733, %v705
      %v801 = vshrl.u32 %v705, 16
      %v802 = vshrl.u32 %v733, 16
      %v803 = vpack.i.b16 %v802, %v801
      %v806 = vpack.i.b16 %v731, %v703
      %v807 = vshrl.u32 %v703, 16
      %v808 = vshrl.u32 %v731, 16
      %v809 = vpack.i.b16 %v808, %v807
      %v812 = vpack.i.b16 %v735, %v707
      %v813 = vshrl.u32 %v707, 16
      %v814 = vshrl.u32 %v735, 16
      %v815 = vpack.i.b16 %v814, %v813
      %v818 = vpack.i.b16 %v783, %v755
      %v819 = vshrl.u32 %v755, 16
      %v820 = vshrl.u32 %v783, 16
      %v821 = vpack.i.b16 %v820, %v819
      %v824 = vpack.i.b16 %v789, %v761
      %v825 = vshrl.u32 %v761, 16
      %v826 = vshrl.u32 %v789, 16
      %v827 = vpack.i.b16 %v826, %v825
      %v830 = vpack.i.b16 %v787, %v759
      %v831 = vshrl.u32 %v759, 16
      %v832 = vshrl.u32 %v787, 16
      %v833 = vpack.i.b16 %v832, %v831
      %v836 = vpack.i.b16 %v791, %v763
      %v837 = vshrl.u32 %v763, 16
      %v838 = vshrl.u32 %v791, 16
      %v839 = vpack.i.b16 %v838, %v837
      %841 = vrot.lane.b32.xlu0 %v222, 124
      %v842 = vpop.permute.xlu0 %841
      %843 = vrot.lane.b32.xlu0 %v222, 120
      %v844 = vpop.permute.xlu0 %843
      %845 = vrot.lane.b32.xlu0 %v222, 116
      %v846 = vpop.permute.xlu0 %845
      %847 = vrot.lane.b32.xlu0 %v222, 112
      %v848 = vpop.permute.xlu0 %847
      %849 = vrot.lane.b32.xlu0 %v222, 108
      %v850 = vpop.permute.xlu0 %849
      %851 = vrot.lane.b32.xlu0 %v222, 104
      %v852 = vpop.permute.xlu0 %851
      %853 = vrot.lane.b32.xlu0 %v222, 100
      %v854 = vpop.permute.xlu0 %853
      %855 = vrot.lane.b32.xlu0 %v222, 96
      %v856 = vpop.permute.xlu0 %855
      %857 = vrot.lane.b32.xlu0 %v222, 92
      %v858 = vpop.permute.xlu0 %857
      %859 = vrot.lane.b32.xlu0 %v222, 88
      %v860 = vpop.permute.xlu0 %859
      %861 = vrot.lane.b32.xlu0 %v222, 84
      %v862 = vpop.permute.xlu0 %861
      %863 = vrot.lane.b32.xlu0 %v222, 80
      %v864 = vpop.permute.xlu0 %863
      %865 = vrot.lane.b32.xlu0 %v222, 76
      %v866 = vpop.permute.xlu0 %865
      %867 = vrot.lane.b32.xlu0 %v222, 72
      %v868 = vpop.permute.xlu0 %867
      %869 = vrot.lane.b32.xlu0 %v222, 68
      %v870 = vpop.permute.xlu0 %869
      %vm871 = vsmask.f32 3328
      %vm872 = vsmask.f32 7440
      %vm873 = vmor %vm871, %vm872
      %v875 = vshrl.u32 %v221, 16
      %v877 = vrot.slane %v875, 4
      %v878 = vshll.u32 %v221, 16
      %v880 = vrot.slane %v878, 5
      %v881 = vor.u32 %v877, %v880
      %v882 = vrot.slane %v881, 4
      %v884 = vshll.u32 %v222, 16
      %v886 = vrot.slane %v884, 5
      %v887 = vsel %vm873, %v882, %v886
      %v889 = vshrl.u32 %v225, 16
      %v891 = vrot.slane %v889, 4
      %v892 = vshll.u32 %v225, 16
      %v894 = vrot.slane %v892, 5
      %v895 = vor.u32 %v891, %v894
      %v896 = vrot.slane %v895, 4
      %v898 = vshll.u32 %v842, 16
      %v900 = vrot.slane %v898, 5
      %v901 = vsel %vm873, %v896, %v900
      %v903 = vshrl.u32 %v228, 16
      %v905 = vrot.slane %v903, 4
      %v906 = vshll.u32 %v228, 16
      %v908 = vrot.slane %v906, 5
      %v909 = vor.u32 %v905, %v908
      %v910 = vrot.slane %v909, 4
      %v912 = vshll.u32 %v844, 16
      %v914 = vrot.slane %v912, 5
      %v915 = vsel %vm873, %v910, %v914
      %v917 = vshrl.u32 %v231, 16
      %v919 = vrot.slane %v917, 4
      %v920 = vshll.u32 %v231, 16
      %v922 = vrot.slane %v920, 5
      %v923 = vor.u32 %v919, %v922
      %v924 = vrot.slane %v923, 4
      %v926 = vshll.u32 %v846, 16
      %v928 = vrot.slane %v926, 5
      %v929 = vsel %vm873, %v924, %v928
      %v931 = vshrl.u32 %v234, 16
      %v933 = vrot.slane %v931, 4
      %v934 = vshll.u32 %v234, 16
      %v936 = vrot.slane %v934, 5
      %v937 = vor.u32 %v933, %v936
      %v938 = vrot.slane %v937, 4
      %v940 = vshll.u32 %v848, 16
      %v942 = vrot.slane %v940, 5
      %v943 = vsel %vm873, %v938, %v942
      %v945 = vshrl.u32 %v237, 16
      %v947 = vrot.slane %v945, 4
      %v948 = vshll.u32 %v237, 16
      %v950 = vrot.slane %v948, 5
      %v951 = vor.u32 %v947, %v950
      %v952 = vrot.slane %v951, 4
      %v954 = vshll.u32 %v850, 16
      %v956 = vrot.slane %v954, 5
      %v957 = vsel %vm873, %v952, %v956
      %v959 = vshrl.u32 %v240, 16
      %v961 = vrot.slane %v959, 4
      %v962 = vshll.u32 %v240, 16
      %v964 = vrot.slane %v962, 5
      %v965 = vor.u32 %v961, %v964
      %v966 = vrot.slane %v965, 4
      %v968 = vshll.u32 %v852, 16
      %v970 = vrot.slane %v968, 5
      %v971 = vsel %vm873, %v966, %v970
      %v973 = vshrl.u32 %v243, 16
      %v975 = vrot.slane %v973, 4
      %v976 = vshll.u32 %v243, 16
      %v978 = vrot.slane %v976, 5
      %v979 = vor.u32 %v975, %v978
      %v980 = vrot.slane %v979, 4
      %v982 = vshll.u32 %v854, 16
      %v984 = vrot.slane %v982, 5
      %v985 = vsel %vm873, %v980, %v984
      %v987 = vshrl.u32 %v246, 16
      %v989 = vrot.slane %v987, 4
      %v990 = vshll.u32 %v246, 16
      %v992 = vrot.slane %v990, 5
      %v993 = vor.u32 %v989, %v992
      %v994 = vrot.slane %v993, 4
      %v996 = vshll.u32 %v856, 16
      %v998 = vrot.slane %v996, 5
      %v999 = vsel %vm873, %v994, %v998
      %v1001 = vshrl.u32 %v249, 16
      %v1003 = vrot.slane %v1001, 4
      %v1004 = vshll.u32 %v249, 16
      %v1006 = vrot.slane %v1004, 5
      %v1007 = vor.u32 %v1003, %v1006
      %v1008 = vrot.slane %v1007, 4
      %v1010 = vshll.u32 %v858, 16
      %v1012 = vrot.slane %v1010, 5
      %v1013 = vsel %vm873, %v1008, %v1012
      %v1015 = vshrl.u32 %v252, 16
      %v1017 = vrot.slane %v1015, 4
      %v1018 = vshll.u32 %v252, 16
      %v1020 = vrot.slane %v1018, 5
      %v1021 = vor.u32 %v1017, %v1020
      %v1022 = vrot.slane %v1021, 4
      %v1024 = vshll.u32 %v860, 16
      %v1026 = vrot.slane %v1024, 5
      %v1027 = vsel %vm873, %v1022, %v1026
      %v1029 = vshrl.u32 %v255, 16
      %v1031 = vrot.slane %v1029, 4
      %v1032 = vshll.u32 %v255, 16
      %v1034 = vrot.slane %v1032, 5
      %v1035 = vor.u32 %v1031, %v1034
      %v1036 = vrot.slane %v1035, 4
      %v1038 = vshll.u32 %v862, 16
      %v1040 = vrot.slane %v1038, 5
      %v1041 = vsel %vm873, %v1036, %v1040
      %v1043 = vshrl.u32 %v258, 16
      %v1045 = vrot.slane %v1043, 4
      %v1046 = vshll.u32 %v258, 16
      %v1048 = vrot.slane %v1046, 5
      %v1049 = vor.u32 %v1045, %v1048
      %v1050 = vrot.slane %v1049, 4
      %v1052 = vshll.u32 %v864, 16
      %v1054 = vrot.slane %v1052, 5
      %v1055 = vsel %vm873, %v1050, %v1054
      %v1057 = vshrl.u32 %v261, 16
      %v1059 = vrot.slane %v1057, 4
      %v1060 = vshll.u32 %v261, 16
      %v1062 = vrot.slane %v1060, 5
      %v1063 = vor.u32 %v1059, %v1062
      %v1064 = vrot.slane %v1063, 4
      %v1066 = vshll.u32 %v866, 16
      %v1068 = vrot.slane %v1066, 5
      %v1069 = vsel %vm873, %v1064, %v1068
      %v1071 = vshrl.u32 %v264, 16
      %v1073 = vrot.slane %v1071, 4
      %v1074 = vshll.u32 %v264, 16
      %v1076 = vrot.slane %v1074, 5
      %v1077 = vor.u32 %v1073, %v1076
      %v1078 = vrot.slane %v1077, 4
      %v1080 = vshll.u32 %v868, 16
      %v1082 = vrot.slane %v1080, 5
      %v1083 = vsel %vm873, %v1078, %v1082
      %v1085 = vshrl.u32 %v267, 16
      %v1087 = vrot.slane %v1085, 4
      %v1088 = vshll.u32 %v267, 16
      %v1090 = vrot.slane %v1088, 5
      %v1091 = vor.u32 %v1087, %v1090
      %v1092 = vrot.slane %v1091, 4
      %v1094 = vshll.u32 %v870, 16
      %v1096 = vrot.slane %v1094, 5
      %v1097 = vsel %vm873, %v1092, %v1096
      %v1114 = vrot.slane %v943, 4
      %v1115 = vsel %vm270, %v1114, %v887
      %v1117 = vunpack.c.l.s4 1983009808
      %v1118 = vunpack.c.0.s8 %v1117
      %v1119 = vperm.slane %v1115, %v1118
      %v1120 = vrot.slane %v971, 4
      %v1121 = vsel %vm270, %v1120, %v915
      %v1123 = vunpack.c.l.s4 1983009808
      %v1124 = vunpack.c.0.s8 %v1123
      %v1125 = vperm.slane %v1121, %v1124
      %v1126 = vrot.slane %v1125, 4
      %v1127 = vsel %vm270, %v1126, %v1119
      %v1128 = vrot.slane %v1119, 4
      %v1129 = vsel %vm270, %v1125, %v1128
      %v1131 = vunpack.c.l.s4 1934713408
      %v1132 = vunpack.c.0.s8 %v1131
      %v1133 = vperm.slane %v1127, %v1132
      %v1135 = vunpack.c.l.s4 1934713408
      %v1136 = vunpack.c.0.s8 %v1135
      %v1137 = vperm.slane %v1129, %v1136
      %v1138 = vrot.slane %v1133, 4
      %v1139 = vsel %vm270, 0, %v1138
      %v1140 = vrot.slane %v1137, 4
      %v1141 = vsel %vm270, 0, %v1140
      %v1142 = vrot.slane %v957, 4
      %v1143 = vsel %vm270, %v1142, %v901
      %v1145 = vunpack.c.l.s4 1983009808
      %v1146 = vunpack.c.0.s8 %v1145
      %v1147 = vperm.slane %v1143, %v1146
      %v1148 = vrot.slane %v985, 4
      %v1149 = vsel %vm270, %v1148, %v929
      %v1151 = vunpack.c.l.s4 1983009808
      %v1152 = vunpack.c.0.s8 %v1151
      %v1153 = vperm.slane %v1149, %v1152
      %v1154 = vrot.slane %v1153, 4
      %v1155 = vsel %vm270, %v1154, %v1147
      %v1156 = vrot.slane %v1147, 4
      %v1157 = vsel %vm270, %v1153, %v1156
      %v1159 = vunpack.c.l.s4 1934713408
      %v1160 = vunpack.c.0.s8 %v1159
      %v1161 = vperm.slane %v1155, %v1160
      %v1163 = vunpack.c.l.s4 1934713408
      %v1164 = vunpack.c.0.s8 %v1163
      %v1165 = vperm.slane %v1157, %v1164
      %v1166 = vrot.slane %v1161, 4
      %v1167 = vsel %vm270, 0, %v1166
      %v1168 = vrot.slane %v1165, 4
      %v1169 = vsel %vm270, 0, %v1168
      %v1170 = vrot.slane %v1055, 4
      %v1171 = vsel %vm270, %v1170, %v999
      %v1173 = vunpack.c.l.s4 1983009808
      %v1174 = vunpack.c.0.s8 %v1173
      %v1175 = vperm.slane %v1171, %v1174
      %v1176 = vrot.slane %v1083, 4
      %v1177 = vsel %vm270, %v1176, %v1027
      %v1179 = vunpack.c.l.s4 1983009808
      %v1180 = vunpack.c.0.s8 %v1179
      %v1181 = vperm.slane %v1177, %v1180
      %v1182 = vrot.slane %v1181, 4
      %v1183 = vsel %vm270, %v1182, %v1175
      %v1184 = vrot.slane %v1175, 4
      %v1185 = vsel %vm270, %v1181, %v1184
      %v1187 = vunpack.c.l.s4 1934713408
      %v1188 = vunpack.c.0.s8 %v1187
      %v1189 = vperm.slane %v1183, %v1188
      %v1191 = vunpack.c.l.s4 1934713408
      %v1192 = vunpack.c.0.s8 %v1191
      %v1193 = vperm.slane %v1185, %v1192
      %v1194 = vrot.slane %v1189, 4
      %v1195 = vsel %vm270, 0, %v1194
      %v1196 = vrot.slane %v1193, 4
      %v1197 = vsel %vm270, 0, %v1196
      %v1198 = vrot.slane %v1069, 4
      %v1199 = vsel %vm270, %v1198, %v1013
      %v1201 = vunpack.c.l.s4 1983009808
      %v1202 = vunpack.c.0.s8 %v1201
      %v1203 = vperm.slane %v1199, %v1202
      %v1204 = vrot.slane %v1097, 4
      %v1205 = vsel %vm270, %v1204, %v1041
      %v1207 = vunpack.c.l.s4 1983009808
      %v1208 = vunpack.c.0.s8 %v1207
      %v1209 = vperm.slane %v1205, %v1208
      %v1210 = vrot.slane %v1209, 4
      %v1211 = vsel %vm270, %v1210, %v1203
      %v1212 = vrot.slane %v1203, 4
      %v1213 = vsel %vm270, %v1209, %v1212
      %v1215 = vunpack.c.l.s4 1934713408
      %v1216 = vunpack.c.0.s8 %v1215
      %v1217 = vperm.slane %v1211, %v1216
      %v1219 = vunpack.c.l.s4 1934713408
      %v1220 = vunpack.c.0.s8 %v1219
      %v1221 = vperm.slane %v1213, %v1220
      %v1222 = vrot.slane %v1217, 4
      %v1223 = vsel %vm270, 0, %v1222
      %v1224 = vrot.slane %v1221, 4
      %v1225 = vsel %vm270, 0, %v1224
      %v1228 = vpack.i.b16 %v1161, %v1133
      %v1229 = vshrl.u32 %v1133, 16
      %v1230 = vshrl.u32 %v1161, 16
      %v1231 = vpack.i.b16 %v1230, %v1229
      %v1234 = vpack.i.b16 %v1167, %v1139
      %v1235 = vshrl.u32 %v1139, 16
      %v1236 = vshrl.u32 %v1167, 16
      %v1237 = vpack.i.b16 %v1236, %v1235
      %v1240 = vpack.i.b16 %v1165, %v1137
      %v1241 = vshrl.u32 %v1137, 16
      %v1242 = vshrl.u32 %v1165, 16
      %v1243 = vpack.i.b16 %v1242, %v1241
      %v1246 = vpack.i.b16 %v1169, %v1141
      %v1247 = vshrl.u32 %v1141, 16
      %v1248 = vshrl.u32 %v1169, 16
      %v1249 = vpack.i.b16 %v1248, %v1247
      %v1252 = vpack.i.b16 %v1217, %v1189
      %v1253 = vshrl.u32 %v1189, 16
      %v1254 = vshrl.u32 %v1217, 16
      %v1255 = vpack.i.b16 %v1254, %v1253
      %v1258 = vpack.i.b16 %v1223, %v1195
      %v1259 = vshrl.u32 %v1195, 16
      %v1260 = vshrl.u32 %v1223, 16
      %v1261 = vpack.i.b16 %v1260, %v1259
      %v1264 = vpack.i.b16 %v1221, %v1193
      %v1265 = vshrl.u32 %v1193, 16
      %v1266 = vshrl.u32 %v1221, 16
      %v1267 = vpack.i.b16 %v1266, %v1265
      %v1270 = vpack.i.b16 %v1225, %v1197
      %v1271 = vshrl.u32 %v1197, 16
      %v1272 = vshrl.u32 %v1225, 16
      %v1273 = vpack.i.b16 %v1272, %v1271
      %1274 = vrot.lane.b32.xlu0 %v887, 124
      %v1275 = vpop.permute.xlu0 %1274
      %1276 = vrot.lane.b32.xlu0 %v901, 124
      %v1277 = vpop.permute.xlu0 %1276
      %1278 = vrot.lane.b32.xlu0 %v915, 124
      %v1279 = vpop.permute.xlu0 %1278
      %1280 = vrot.lane.b32.xlu0 %v929, 124
      %v1281 = vpop.permute.xlu0 %1280
      %1282 = vrot.lane.b32.xlu0 %v943, 124
      %v1283 = vpop.permute.xlu0 %1282
      %1284 = vrot.lane.b32.xlu0 %v957, 124
      %v1285 = vpop.permute.xlu0 %1284
      %1286 = vrot.lane.b32.xlu0 %v971, 124
      %v1287 = vpop.permute.xlu0 %1286
      %1288 = vrot.lane.b32.xlu0 %v985, 124
      %v1289 = vpop.permute.xlu0 %1288
      %1290 = vrot.lane.b32.xlu0 %v999, 124
      %v1291 = vpop.permute.xlu0 %1290
      %1292 = vrot.lane.b32.xlu0 %v1013, 124
      %v1293 = vpop.permute.xlu0 %1292
      %1294 = vrot.lane.b32.xlu0 %v1027, 124
      %v1295 = vpop.permute.xlu0 %1294
      %1296 = vrot.lane.b32.xlu0 %v1041, 124
      %v1297 = vpop.permute.xlu0 %1296
      %1298 = vrot.lane.b32.xlu0 %v1055, 124
      %v1299 = vpop.permute.xlu0 %1298
      %1300 = vrot.lane.b32.xlu0 %v1069, 124
      %v1301 = vpop.permute.xlu0 %1300
      %1302 = vrot.lane.b32.xlu0 %v1083, 124
      %v1303 = vpop.permute.xlu0 %1302
      %1304 = vrot.lane.b32.xlu0 %v1097, 124
      %v1305 = vpop.permute.xlu0 %1304
      %v1322 = vrot.slane %v1283, 4
      %v1323 = vsel %vm270, %v1322, %v1275
      %v1325 = vunpack.c.l.s4 1983009808
      %v1326 = vunpack.c.0.s8 %v1325
      %v1327 = vperm.slane %v1323, %v1326
      %v1328 = vrot.slane %v1287, 4
      %v1329 = vsel %vm270, %v1328, %v1279
      %v1331 = vunpack.c.l.s4 1983009808
      %v1332 = vunpack.c.0.s8 %v1331
      %v1333 = vperm.slane %v1329, %v1332
      %v1334 = vrot.slane %v1333, 4
      %v1335 = vsel %vm270, %v1334, %v1327
      %v1336 = vrot.slane %v1327, 4
      %v1337 = vsel %vm270, %v1333, %v1336
      %v1339 = vunpack.c.l.s4 1934713408
      %v1340 = vunpack.c.0.s8 %v1339
      %v1341 = vperm.slane %v1335, %v1340
      %v1343 = vunpack.c.l.s4 1934713408
      %v1344 = vunpack.c.0.s8 %v1343
      %v1345 = vperm.slane %v1337, %v1344
      %v1346 = vrot.slane %v1341, 4
      %v1347 = vsel %vm270, 0, %v1346
      %v1348 = vrot.slane %v1345, 4
      %v1349 = vsel %vm270, 0, %v1348
      %v1350 = vrot.slane %v1285, 4
      %v1351 = vsel %vm270, %v1350, %v1277
      %v1353 = vunpack.c.l.s4 1983009808
      %v1354 = vunpack.c.0.s8 %v1353
      %v1355 = vperm.slane %v1351, %v1354
      %v1356 = vrot.slane %v1289, 4
      %v1357 = vsel %vm270, %v1356, %v1281
      %v1359 = vunpack.c.l.s4 1983009808
      %v1360 = vunpack.c.0.s8 %v1359
      %v1361 = vperm.slane %v1357, %v1360
      %v1362 = vrot.slane %v1361, 4
      %v1363 = vsel %vm270, %v1362, %v1355
      %v1364 = vrot.slane %v1355, 4
      %v1365 = vsel %vm270, %v1361, %v1364
      %v1367 = vunpack.c.l.s4 1934713408
      %v1368 = vunpack.c.0.s8 %v1367
      %v1369 = vperm.slane %v1363, %v1368
      %v1371 = vunpack.c.l.s4 1934713408
      %v1372 = vunpack.c.0.s8 %v1371
      %v1373 = vperm.slane %v1365, %v1372
      %v1374 = vrot.slane %v1369, 4
      %v1375 = vsel %vm270, 0, %v1374
      %v1376 = vrot.slane %v1373, 4
      %v1377 = vsel %vm270, 0, %v1376
      %v1378 = vrot.slane %v1299, 4
      %v1379 = vsel %vm270, %v1378, %v1291
      %v1381 = vunpack.c.l.s4 1983009808
      %v1382 = vunpack.c.0.s8 %v1381
      %v1383 = vperm.slane %v1379, %v1382
      %v1384 = vrot.slane %v1303, 4
      %v1385 = vsel %vm270, %v1384, %v1295
      %v1387 = vunpack.c.l.s4 1983009808
      %v1388 = vunpack.c.0.s8 %v1387
      %v1389 = vperm.slane %v1385, %v1388
      %v1390 = vrot.slane %v1389, 4
      %v1391 = vsel %vm270, %v1390, %v1383
      %v1392 = vrot.slane %v1383, 4
      %v1393 = vsel %vm270, %v1389, %v1392
      %v1395 = vunpack.c.l.s4 1934713408
      %v1396 = vunpack.c.0.s8 %v1395
      %v1397 = vperm.slane %v1391, %v1396
      %v1399 = vunpack.c.l.s4 1934713408
      %v1400 = vunpack.c.0.s8 %v1399
      %v1401 = vperm.slane %v1393, %v1400
      %v1402 = vrot.slane %v1397, 4
      %v1403 = vsel %vm270, 0, %v1402
      %v1404 = vrot.slane %v1401, 4
      %v1405 = vsel %vm270, 0, %v1404
      %v1406 = vrot.slane %v1301, 4
      %v1407 = vsel %vm270, %v1406, %v1293
      %v1409 = vunpack.c.l.s4 1983009808
      %v1410 = vunpack.c.0.s8 %v1409
      %v1411 = vperm.slane %v1407, %v1410
      %v1412 = vrot.slane %v1305, 4
      %v1413 = vsel %vm270, %v1412, %v1297
      %v1415 = vunpack.c.l.s4 1983009808
      %v1416 = vunpack.c.0.s8 %v1415
      %v1417 = vperm.slane %v1413, %v1416
      %v1418 = vrot.slane %v1417, 4
      %v1419 = vsel %vm270, %v1418, %v1411
      %v1420 = vrot.slane %v1411, 4
      %v1421 = vsel %vm270, %v1417, %v1420
      %v1423 = vunpack.c.l.s4 1934713408
      %v1424 = vunpack.c.0.s8 %v1423
      %v1425 = vperm.slane %v1419, %v1424
      %v1427 = vunpack.c.l.s4 1934713408
      %v1428 = vunpack.c.0.s8 %v1427
      %v1429 = vperm.slane %v1421, %v1428
      %v1430 = vrot.slane %v1425, 4
      %v1431 = vsel %vm270, 0, %v1430
      %v1432 = vrot.slane %v1429, 4
      %v1433 = vsel %vm270, 0, %v1432
      %v1436 = vpack.i.b16 %v1369, %v1341
      %v1437 = vshrl.u32 %v1341, 16
      %v1438 = vshrl.u32 %v1369, 16
      %v1439 = vpack.i.b16 %v1438, %v1437
      %v1442 = vpack.i.b16 %v1375, %v1347
      %v1443 = vshrl.u32 %v1347, 16
      %v1444 = vshrl.u32 %v1375, 16
      %v1445 = vpack.i.b16 %v1444, %v1443
      %v1448 = vpack.i.b16 %v1373, %v1345
      %v1449 = vshrl.u32 %v1345, 16
      %v1450 = vshrl.u32 %v1373, 16
      %v1451 = vpack.i.b16 %v1450, %v1449
      %v1454 = vpack.i.b16 %v1377, %v1349
      %v1455 = vshrl.u32 %v1349, 16
      %v1456 = vshrl.u32 %v1377, 16
      %v1457 = vpack.i.b16 %v1456, %v1455
      %v1460 = vpack.i.b16 %v1425, %v1397
      %v1461 = vshrl.u32 %v1397, 16
      %v1462 = vshrl.u32 %v1425, 16
      %v1463 = vpack.i.b16 %v1462, %v1461
      %v1466 = vpack.i.b16 %v1431, %v1403
      %v1467 = vshrl.u32 %v1403, 16
      %v1468 = vshrl.u32 %v1431, 16
      %v1469 = vpack.i.b16 %v1468, %v1467
      %v1472 = vpack.i.b16 %v1429, %v1401
      %v1473 = vshrl.u32 %v1401, 16
      %v1474 = vshrl.u32 %v1429, 16
      %v1475 = vpack.i.b16 %v1474, %v1473
      %v1478 = vpack.i.b16 %v1433, %v1405
      %v1479 = vshrl.u32 %v1405, 16
      %v1480 = vshrl.u32 %v1433, 16
      %v1481 = vpack.i.b16 %v1480, %v1479
      %1482 = vrot.lane.b32.xlu0 %v887, 120
      %v1483 = vpop.permute.xlu0 %1482
      %1484 = vrot.lane.b32.xlu0 %v901, 120
      %v1485 = vpop.permute.xlu0 %1484
      %1486 = vrot.lane.b32.xlu0 %v915, 120
      %v1487 = vpop.permute.xlu0 %1486
      %1488 = vrot.lane.b32.xlu0 %v929, 120
      %v1489 = vpop.permute.xlu0 %1488
      %1490 = vrot.lane.b32.xlu0 %v943, 120
      %v1491 = vpop.permute.xlu0 %1490
      %1492 = vrot.lane.b32.xlu0 %v957, 120
      %v1493 = vpop.permute.xlu0 %1492
      %1494 = vrot.lane.b32.xlu0 %v971, 120
      %v1495 = vpop.permute.xlu0 %1494
      %1496 = vrot.lane.b32.xlu0 %v985, 120
      %v1497 = vpop.permute.xlu0 %1496
      %1498 = vrot.lane.b32.xlu0 %v999, 120
      %v1499 = vpop.permute.xlu0 %1498
      %1500 = vrot.lane.b32.xlu0 %v1013, 120
      %v1501 = vpop.permute.xlu0 %1500
      %1502 = vrot.lane.b32.xlu0 %v1027, 120
      %v1503 = vpop.permute.xlu0 %1502
      %1504 = vrot.lane.b32.xlu0 %v1041, 120
      %v1505 = vpop.permute.xlu0 %1504
      %1506 = vrot.lane.b32.xlu0 %v1055, 120
      %v1507 = vpop.permute.xlu0 %1506
      %1508 = vrot.lane.b32.xlu0 %v1069, 120
      %v1509 = vpop.permute.xlu0 %1508
      %1510 = vrot.lane.b32.xlu0 %v1083, 120
      %v1511 = vpop.permute.xlu0 %1510
      %1512 = vrot.lane.b32.xlu0 %v1097, 120
      %v1513 = vpop.permute.xlu0 %1512
      %v1530 = vrot.slane %v1491, 4
      %v1531 = vsel %vm270, %v1530, %v1483
      %v1533 = vunpack.c.l.s4 1983009808
      %v1534 = vunpack.c.0.s8 %v1533
      %v1535 = vperm.slane %v1531, %v1534
      %v1536 = vrot.slane %v1495, 4
      %v1537 = vsel %vm270, %v1536, %v1487
      %v1539 = vunpack.c.l.s4 1983009808
      %v1540 = vunpack.c.0.s8 %v1539
      %v1541 = vperm.slane %v1537, %v1540
      %v1542 = vrot.slane %v1541, 4
      %v1543 = vsel %vm270, %v1542, %v1535
      %v1544 = vrot.slane %v1535, 4
      %v1545 = vsel %vm270, %v1541, %v1544
      %v1547 = vunpack.c.l.s4 1934713408
      %v1548 = vunpack.c.0.s8 %v1547
      %v1549 = vperm.slane %v1543, %v1548
      %v1551 = vunpack.c.l.s4 1934713408
      %v1552 = vunpack.c.0.s8 %v1551
      %v1553 = vperm.slane %v1545, %v1552
      %v1554 = vrot.slane %v1549, 4
      %v1555 = vsel %vm270, 0, %v1554
      %v1556 = vrot.slane %v1553, 4
      %v1557 = vsel %vm270, 0, %v1556
      %v1558 = vrot.slane %v1493, 4
      %v1559 = vsel %vm270, %v1558, %v1485
      %v1561 = vunpack.c.l.s4 1983009808
      %v1562 = vunpack.c.0.s8 %v1561
      %v1563 = vperm.slane %v1559, %v1562
      %v1564 = vrot.slane %v1497, 4
      %v1565 = vsel %vm270, %v1564, %v1489
      %v1567 = vunpack.c.l.s4 1983009808
      %v1568 = vunpack.c.0.s8 %v1567
      %v1569 = vperm.slane %v1565, %v1568
      %v1570 = vrot.slane %v1569, 4
      %v1571 = vsel %vm270, %v1570, %v1563
      %v1572 = vrot.slane %v1563, 4
      %v1573 = vsel %vm270, %v1569, %v1572
      %v1575 = vunpack.c.l.s4 1934713408
      %v1576 = vunpack.c.0.s8 %v1575
      %v1577 = vperm.slane %v1571, %v1576
      %v1579 = vunpack.c.l.s4 1934713408
      %v1580 = vunpack.c.0.s8 %v1579
      %v1581 = vperm.slane %v1573, %v1580
      %v1582 = vrot.slane %v1577, 4
      %v1583 = vsel %vm270, 0, %v1582
      %v1584 = vrot.slane %v1581, 4
      %v1585 = vsel %vm270, 0, %v1584
      %v1586 = vrot.slane %v1507, 4
      %v1587 = vsel %vm270, %v1586, %v1499
      %v1589 = vunpack.c.l.s4 1983009808
      %v1590 = vunpack.c.0.s8 %v1589
      %v1591 = vperm.slane %v1587, %v1590
      %v1592 = vrot.slane %v1511, 4
      %v1593 = vsel %vm270, %v1592, %v1503
      %v1595 = vunpack.c.l.s4 1983009808
      %v1596 = vunpack.c.0.s8 %v1595
      %v1597 = vperm.slane %v1593, %v1596
      %v1598 = vrot.slane %v1597, 4
      %v1599 = vsel %vm270, %v1598, %v1591
      %v1600 = vrot.slane %v1591, 4
      %v1601 = vsel %vm270, %v1597, %v1600
      %v1603 = vunpack.c.l.s4 1934713408
      %v1604 = vunpack.c.0.s8 %v1603
      %v1605 = vperm.slane %v1599, %v1604
      %v1607 = vunpack.c.l.s4 1934713408
      %v1608 = vunpack.c.0.s8 %v1607
      %v1609 = vperm.slane %v1601, %v1608
      %v1610 = vrot.slane %v1605, 4
      %v1611 = vsel %vm270, 0, %v1610
      %v1612 = vrot.slane %v1609, 4
      %v1613 = vsel %vm270, 0, %v1612
      %v1614 = vrot.slane %v1509, 4
      %v1615 = vsel %vm270, %v1614, %v1501
      %v1617 = vunpack.c.l.s4 1983009808
      %v1618 = vunpack.c.0.s8 %v1617
      %v1619 = vperm.slane %v1615, %v1618
      %v1620 = vrot.slane %v1513, 4
      %v1621 = vsel %vm270, %v1620, %v1505
      %v1623 = vunpack.c.l.s4 1983009808
      %v1624 = vunpack.c.0.s8 %v1623
      %v1625 = vperm.slane %v1621, %v1624
      %v1626 = vrot.slane %v1625, 4
      %v1627 = vsel %vm270, %v1626, %v1619
      %v1628 = vrot.slane %v1619, 4
      %v1629 = vsel %vm270, %v1625, %v1628
      %v1631 = vunpack.c.l.s4 1934713408
      %v1632 = vunpack.c.0.s8 %v1631
      %v1633 = vperm.slane %v1627, %v1632
      %v1635 = vunpack.c.l.s4 1934713408
      %v1636 = vunpack.c.0.s8 %v1635
      %v1637 = vperm.slane %v1629, %v1636
      %v1638 = vrot.slane %v1633, 4
      %v1639 = vsel %vm270, 0, %v1638
      %v1640 = vrot.slane %v1637, 4
      %v1641 = vsel %vm270, 0, %v1640
      %v1644 = vpack.i.b16 %v1577, %v1549
      %v1645 = vshrl.u32 %v1549, 16
      %v1646 = vshrl.u32 %v1577, 16
      %v1647 = vpack.i.b16 %v1646, %v1645
      %v1650 = vpack.i.b16 %v1583, %v1555
      %v1651 = vshrl.u32 %v1555, 16
      %v1652 = vshrl.u32 %v1583, 16
      %v1653 = vpack.i.b16 %v1652, %v1651
      %v1656 = vpack.i.b16 %v1581, %v1553
      %v1657 = vshrl.u32 %v1553, 16
      %v1658 = vshrl.u32 %v1581, 16
      %v1659 = vpack.i.b16 %v1658, %v1657
      %v1662 = vpack.i.b16 %v1585, %v1557
      %v1663 = vshrl.u32 %v1557, 16
      %v1664 = vshrl.u32 %v1585, 16
      %v1665 = vpack.i.b16 %v1664, %v1663
      %v1668 = vpack.i.b16 %v1633, %v1605
      %v1669 = vshrl.u32 %v1605, 16
      %v1670 = vshrl.u32 %v1633, 16
      %v1671 = vpack.i.b16 %v1670, %v1669
      %v1674 = vpack.i.b16 %v1639, %v1611
      %v1675 = vshrl.u32 %v1611, 16
      %v1676 = vshrl.u32 %v1639, 16
      %v1677 = vpack.i.b16 %v1676, %v1675
      %v1680 = vpack.i.b16 %v1637, %v1609
      %v1681 = vshrl.u32 %v1609, 16
      %v1682 = vshrl.u32 %v1637, 16
      %v1683 = vpack.i.b16 %v1682, %v1681
      %v1686 = vpack.i.b16 %v1641, %v1613
      %v1687 = vshrl.u32 %v1613, 16
      %v1688 = vshrl.u32 %v1641, 16
      %v1689 = vpack.i.b16 %v1688, %v1687
      %vm1690 = vcmask 1042432
      %vm1691 = vcmask 1046532
      %vm1692 = vmor %vm1690, %vm1691
      %v1693 = vrot.slane %v221, 5
      %v1694 = vrot.slane %v1693, 4
      %v1695 = vrot.slane %v222, 5
      %v1696 = vsel %vm1692, %v1694, %v1695
      %v1697 = vrot.slane %v225, 5
      %v1698 = vrot.slane %v1697, 4
      %v1699 = vrot.slane %v842, 5
      %v1700 = vsel %vm1692, %v1698, %v1699
      %v1701 = vrot.slane %v228, 5
      %v1702 = vrot.slane %v1701, 4
      %v1703 = vrot.slane %v844, 5
      %v1704 = vsel %vm1692, %v1702, %v1703
      %v1705 = vrot.slane %v231, 5
      %v1706 = vrot.slane %v1705, 4
      %v1707 = vrot.slane %v846, 5
      %v1708 = vsel %vm1692, %v1706, %v1707
      %v1709 = vrot.slane %v234, 5
      %v1710 = vrot.slane %v1709, 4
      %v1711 = vrot.slane %v848, 5
      %v1712 = vsel %vm1692, %v1710, %v1711
      %v1713 = vrot.slane %v237, 5
      %v1714 = vrot.slane %v1713, 4
      %v1715 = vrot.slane %v850, 5
      %v1716 = vsel %vm1692, %v1714, %v1715
      %v1717 = vrot.slane %v240, 5
      %v1718 = vrot.slane %v1717, 4
      %v1719 = vrot.slane %v852, 5
      %v1720 = vsel %vm1692, %v1718, %v1719
      %v1721 = vrot.slane %v243, 5
      %v1722 = vrot.slane %v1721, 4
      %v1723 = vrot.slane %v854, 5
      %v1724 = vsel %vm1692, %v1722, %v1723
      %v1725 = vrot.slane %v246, 5
      %v1726 = vrot.slane %v1725, 4
      %v1727 = vrot.slane %v856, 5
      %v1728 = vsel %vm1692, %v1726, %v1727
      %v1729 = vrot.slane %v249, 5
      %v1730 = vrot.slane %v1729, 4
      %v1731 = vrot.slane %v858, 5
      %v1732 = vsel %vm1692, %v1730, %v1731
      %v1733 = vrot.slane %v252, 5
      %v1734 = vrot.slane %v1733, 4
      %v1735 = vrot.slane %v860, 5
      %v1736 = vsel %vm1692, %v1734, %v1735
      %v1737 = vrot.slane %v255, 5
      %v1738 = vrot.slane %v1737, 4
      %v1739 = vrot.slane %v862, 5
      %v1740 = vsel %vm1692, %v1738, %v1739
      %v1741 = vrot.slane %v258, 5
      %v1742 = vrot.slane %v1741, 4
      %v1743 = vrot.slane %v864, 5
      %v1744 = vsel %vm1692, %v1742, %v1743
      %v1745 = vrot.slane %v261, 5
      %v1746 = vrot.slane %v1745, 4
      %v1747 = vrot.slane %v866, 5
      %v1748 = vsel %vm1692, %v1746, %v1747
      %v1749 = vrot.slane %v264, 5
      %v1750 = vrot.slane %v1749, 4
      %v1751 = vrot.slane %v868, 5
      %v1752 = vsel %vm1692, %v1750, %v1751
      %v1753 = vrot.slane %v267, 5
      %v1754 = vrot.slane %v1753, 4
      %v1755 = vrot.slane %v870, 5
      %v1756 = vsel %vm1692, %v1754, %v1755
      %v1773 = vrot.slane %v1712, 4
      %v1774 = vsel %vm270, %v1773, %v1696
      %v1776 = vunpack.c.l.s4 1983009808
      %v1777 = vunpack.c.0.s8 %v1776
      %v1778 = vperm.slane %v1774, %v1777
      %v1779 = vrot.slane %v1720, 4
      %v1780 = vsel %vm270, %v1779, %v1704
      %v1782 = vunpack.c.l.s4 1983009808
      %v1783 = vunpack.c.0.s8 %v1782
      %v1784 = vperm.slane %v1780, %v1783
      %v1785 = vrot.slane %v1784, 4
      %v1786 = vsel %vm270, %v1785, %v1778
      %v1787 = vrot.slane %v1778, 4
      %v1788 = vsel %vm270, %v1784, %v1787
      %v1790 = vunpack.c.l.s4 1934713408
      %v1791 = vunpack.c.0.s8 %v1790
      %v1792 = vperm.slane %v1786, %v1791
      %v1794 = vunpack.c.l.s4 1934713408
      %v1795 = vunpack.c.0.s8 %v1794
      %v1796 = vperm.slane %v1788, %v1795
      %v1797 = vrot.slane %v1792, 4
      %v1798 = vsel %vm270, 0, %v1797
      %v1799 = vrot.slane %v1796, 4
      %v1800 = vsel %vm270, 0, %v1799
      %v1801 = vrot.slane %v1716, 4
      %v1802 = vsel %vm270, %v1801, %v1700
      %v1804 = vunpack.c.l.s4 1983009808
      %v1805 = vunpack.c.0.s8 %v1804
      %v1806 = vperm.slane %v1802, %v1805
      %v1807 = vrot.slane %v1724, 4
      %v1808 = vsel %vm270, %v1807, %v1708
      %v1810 = vunpack.c.l.s4 1983009808
      %v1811 = vunpack.c.0.s8 %v1810
      %v1812 = vperm.slane %v1808, %v1811
      %v1813 = vrot.slane %v1812, 4
      %v1814 = vsel %vm270, %v1813, %v1806
      %v1815 = vrot.slane %v1806, 4
      %v1816 = vsel %vm270, %v1812, %v1815
      %v1818 = vunpack.c.l.s4 1934713408
      %v1819 = vunpack.c.0.s8 %v1818
      %v1820 = vperm.slane %v1814, %v1819
      %v1822 = vunpack.c.l.s4 1934713408
      %v1823 = vunpack.c.0.s8 %v1822
      %v1824 = vperm.slane %v1816, %v1823
      %v1825 = vrot.slane %v1820, 4
      %v1826 = vsel %vm270, 0, %v1825
      %v1827 = vrot.slane %v1824, 4
      %v1828 = vsel %vm270, 0, %v1827
      %v1829 = vrot.slane %v1744, 4
      %v1830 = vsel %vm270, %v1829, %v1728
      %v1832 = vunpack.c.l.s4 1983009808
      %v1833 = vunpack.c.0.s8 %v1832
      %v1834 = vperm.slane %v1830, %v1833
      %v1835 = vrot.slane %v1752, 4
      %v1836 = vsel %vm270, %v1835, %v1736
      %v1838 = vunpack.c.l.s4 1983009808
      %v1839 = vunpack.c.0.s8 %v1838
      %v1840 = vperm.slane %v1836, %v1839
      %v1841 = vrot.slane %v1840, 4
      %v1842 = vsel %vm270, %v1841, %v1834
      %v1843 = vrot.slane %v1834, 4
      %v1844 = vsel %vm270, %v1840, %v1843
      %v1846 = vunpack.c.l.s4 1934713408
      %v1847 = vunpack.c.0.s8 %v1846
      %v1848 = vperm.slane %v1842, %v1847
      %v1850 = vunpack.c.l.s4 1934713408
      %v1851 = vunpack.c.0.s8 %v1850
      %v1852 = vperm.slane %v1844, %v1851
      %v1853 = vrot.slane %v1848, 4
      %v1854 = vsel %vm270, 0, %v1853
      %v1855 = vrot.slane %v1852, 4
      %v1856 = vsel %vm270, 0, %v1855
      %v1857 = vrot.slane %v1748, 4
      %v1858 = vsel %vm270, %v1857, %v1732
      %v1860 = vunpack.c.l.s4 1983009808
      %v1861 = vunpack.c.0.s8 %v1860
      %v1862 = vperm.slane %v1858, %v1861
      %v1863 = vrot.slane %v1756, 4
      %v1864 = vsel %vm270, %v1863, %v1740
      %v1866 = vunpack.c.l.s4 1983009808
      %v1867 = vunpack.c.0.s8 %v1866
      %v1868 = vperm.slane %v1864, %v1867
      %v1869 = vrot.slane %v1868, 4
      %v1870 = vsel %vm270, %v1869, %v1862
      %v1871 = vrot.slane %v1862, 4
      %v1872 = vsel %vm270, %v1868, %v1871
      %v1874 = vunpack.c.l.s4 1934713408
      %v1875 = vunpack.c.0.s8 %v1874
      %v1876 = vperm.slane %v1870, %v1875
      %v1878 = vunpack.c.l.s4 1934713408
      %v1879 = vunpack.c.0.s8 %v1878
      %v1880 = vperm.slane %v1872, %v1879
      %v1881 = vrot.slane %v1876, 4
      %v1882 = vsel %vm270, 0, %v1881
      %v1883 = vrot.slane %v1880, 4
      %v1884 = vsel %vm270, 0, %v1883
      %v1887 = vpack.i.b16 %v1820, %v1792
      %v1888 = vshrl.u32 %v1792, 16
      %v1889 = vshrl.u32 %v1820, 16
      %v1890 = vpack.i.b16 %v1889, %v1888
      %v1893 = vpack.i.b16 %v1826, %v1798
      %v1894 = vshrl.u32 %v1798, 16
      %v1895 = vshrl.u32 %v1826, 16
      %v1896 = vpack.i.b16 %v1895, %v1894
      %v1899 = vpack.i.b16 %v1824, %v1796
      %v1900 = vshrl.u32 %v1796, 16
      %v1901 = vshrl.u32 %v1824, 16
      %v1902 = vpack.i.b16 %v1901, %v1900
      %v1905 = vpack.i.b16 %v1828, %v1800
      %v1906 = vshrl.u32 %v1800, 16
      %v1907 = vshrl.u32 %v1828, 16
      %v1908 = vpack.i.b16 %v1907, %v1906
      %v1911 = vpack.i.b16 %v1876, %v1848
      %v1912 = vshrl.u32 %v1848, 16
      %v1913 = vshrl.u32 %v1876, 16
      %v1914 = vpack.i.b16 %v1913, %v1912
      %v1917 = vpack.i.b16 %v1882, %v1854
      %v1918 = vshrl.u32 %v1854, 16
      %v1919 = vshrl.u32 %v1882, 16
      %v1920 = vpack.i.b16 %v1919, %v1918
      %v1923 = vpack.i.b16 %v1880, %v1852
      %v1924 = vshrl.u32 %v1852, 16
      %v1925 = vshrl.u32 %v1880, 16
      %v1926 = vpack.i.b16 %v1925, %v1924
      %v1929 = vpack.i.b16 %v1884, %v1856
      %v1930 = vshrl.u32 %v1856, 16
      %v1931 = vshrl.u32 %v1884, 16
      %v1932 = vpack.i.b16 %v1931, %v1930
      %1933 = vrot.lane.b32.xlu0 %v1696, 124
      %v1934 = vpop.permute.xlu0 %1933
      %1935 = vrot.lane.b32.xlu0 %v1700, 124
      %v1936 = vpop.permute.xlu0 %1935
      %1937 = vrot.lane.b32.xlu0 %v1704, 124
      %v1938 = vpop.permute.xlu0 %1937
      %1939 = vrot.lane.b32.xlu0 %v1708, 124
      %v1940 = vpop.permute.xlu0 %1939
      %1941 = vrot.lane.b32.xlu0 %v1712, 124
      %v1942 = vpop.permute.xlu0 %1941
      %1943 = vrot.lane.b32.xlu0 %v1716, 124
      %v1944 = vpop.permute.xlu0 %1943
      %1945 = vrot.lane.b32.xlu0 %v1720, 124
      %v1946 = vpop.permute.xlu0 %1945
      %1947 = vrot.lane.b32.xlu0 %v1724, 124
      %v1948 = vpop.permute.xlu0 %1947
      %1949 = vrot.lane.b32.xlu0 %v1728, 124
      %v1950 = vpop.permute.xlu0 %1949
      %1951 = vrot.lane.b32.xlu0 %v1732, 124
      %v1952 = vpop.permute.xlu0 %1951
      %1953 = vrot.lane.b32.xlu0 %v1736, 124
      %v1954 = vpop.permute.xlu0 %1953
      %1955 = vrot.lane.b32.xlu0 %v1740, 124
      %v1956 = vpop.permute.xlu0 %1955
      %1957 = vrot.lane.b32.xlu0 %v1744, 124
      %v1958 = vpop.permute.xlu0 %1957
      %1959 = vrot.lane.b32.xlu0 %v1748, 124
      %v1960 = vpop.permute.xlu0 %1959
      %1961 = vrot.lane.b32.xlu0 %v1752, 124
      %v1962 = vpop.permute.xlu0 %1961
      %1963 = vrot.lane.b32.xlu0 %v1756, 124
      %v1964 = vpop.permute.xlu0 %1963
      %v1981 = vrot.slane %v1942, 4
      %v1982 = vsel %vm270, %v1981, %v1934
      %v1984 = vunpack.c.l.s4 1983009808
      %v1985 = vunpack.c.0.s8 %v1984
      %v1986 = vperm.slane %v1982, %v1985
      %v1987 = vrot.slane %v1946, 4
      %v1988 = vsel %vm270, %v1987, %v1938
      %v1990 = vunpack.c.l.s4 1983009808
      %v1991 = vunpack.c.0.s8 %v1990
      %v1992 = vperm.slane %v1988, %v1991
      %v1993 = vrot.slane %v1992, 4
      %v1994 = vsel %vm270, %v1993, %v1986
      %v1995 = vrot.slane %v1986, 4
      %v1996 = vsel %vm270, %v1992, %v1995
      %v1998 = vunpack.c.l.s4 1934713408
      %v1999 = vunpack.c.0.s8 %v1998
      %v2000 = vperm.slane %v1994, %v1999
      %v2002 = vunpack.c.l.s4 1934713408
      %v2003 = vunpack.c.0.s8 %v2002
      %v2004 = vperm.slane %v1996, %v2003
      %v2005 = vrot.slane %v2000, 4
      %v2006 = vsel %vm270, 0, %v2005
      %v2007 = vrot.slane %v2004, 4
      %v2008 = vsel %vm270, 0, %v2007
      %v2009 = vrot.slane %v1944, 4
      %v2010 = vsel %vm270, %v2009, %v1936
      %v2012 = vunpack.c.l.s4 1983009808
      %v2013 = vunpack.c.0.s8 %v2012
      %v2014 = vperm.slane %v2010, %v2013
      %v2015 = vrot.slane %v1948, 4
      %v2016 = vsel %vm270, %v2015, %v1940
      %v2018 = vunpack.c.l.s4 1983009808
      %v2019 = vunpack.c.0.s8 %v2018
      %v2020 = vperm.slane %v2016, %v2019
      %v2021 = vrot.slane %v2020, 4
      %v2022 = vsel %vm270, %v2021, %v2014
      %v2023 = vrot.slane %v2014, 4
      %v2024 = vsel %vm270, %v2020, %v2023
      %v2026 = vunpack.c.l.s4 1934713408
      %v2027 = vunpack.c.0.s8 %v2026
      %v2028 = vperm.slane %v2022, %v2027
      %v2030 = vunpack.c.l.s4 1934713408
      %v2031 = vunpack.c.0.s8 %v2030
      %v2032 = vperm.slane %v2024, %v2031
      %v2033 = vrot.slane %v2028, 4
      %v2034 = vsel %vm270, 0, %v2033
      %v2035 = vrot.slane %v2032, 4
      %v2036 = vsel %vm270, 0, %v2035
      %v2037 = vrot.slane %v1958, 4
      %v2038 = vsel %vm270, %v2037, %v1950
      %v2040 = vunpack.c.l.s4 1983009808
      %v2041 = vunpack.c.0.s8 %v2040
      %v2042 = vperm.slane %v2038, %v2041
      %v2043 = vrot.slane %v1962, 4
      %v2044 = vsel %vm270, %v2043, %v1954
      %v2046 = vunpack.c.l.s4 1983009808
      %v2047 = vunpack.c.0.s8 %v2046
      %v2048 = vperm.slane %v2044, %v2047
      %v2049 = vrot.slane %v2048, 4
      %v2050 = vsel %vm270, %v2049, %v2042
      %v2051 = vrot.slane %v2042, 4
      %v2052 = vsel %vm270, %v2048, %v2051
      %v2054 = vunpack.c.l.s4 1934713408
      %v2055 = vunpack.c.0.s8 %v2054
      %v2056 = vperm.slane %v2050, %v2055
      %v2058 = vunpack.c.l.s4 1934713408
      %v2059 = vunpack.c.0.s8 %v2058
      %v2060 = vperm.slane %v2052, %v2059
      %v2061 = vrot.slane %v2056, 4
      %v2062 = vsel %vm270, 0, %v2061
      %v2063 = vrot.slane %v2060, 4
      %v2064 = vsel %vm270, 0, %v2063
      %v2065 = vrot.slane %v1960, 4
      %v2066 = vsel %vm270, %v2065, %v1952
      %v2068 = vunpack.c.l.s4 1983009808
      %v2069 = vunpack.c.0.s8 %v2068
      %v2070 = vperm.slane %v2066, %v2069
      %v2071 = vrot.slane %v1964, 4
      %v2072 = vsel %vm270, %v2071, %v1956
      %v2074 = vunpack.c.l.s4 1983009808
      %v2075 = vunpack.c.0.s8 %v2074
      %v2076 = vperm.slane %v2072, %v2075
      %v2077 = vrot.slane %v2076, 4
      %v2078 = vsel %vm270, %v2077, %v2070
      %v2079 = vrot.slane %v2070, 4
      %v2080 = vsel %vm270, %v2076, %v2079
      %v2082 = vunpack.c.l.s4 1934713408
      %v2083 = vunpack.c.0.s8 %v2082
      %v2084 = vperm.slane %v2078, %v2083
      %v2086 = vunpack.c.l.s4 1934713408
      %v2087 = vunpack.c.0.s8 %v2086
      %v2088 = vperm.slane %v2080, %v2087
      %v2089 = vrot.slane %v2084, 4
      %v2090 = vsel %vm270, 0, %v2089
      %v2091 = vrot.slane %v2088, 4
      %v2092 = vsel %vm270, 0, %v2091
      %v2095 = vpack.i.b16 %v2028, %v2000
      %v2096 = vshrl.u32 %v2000, 16
      %v2097 = vshrl.u32 %v2028, 16
      %v2098 = vpack.i.b16 %v2097, %v2096
      %v2101 = vpack.i.b16 %v2034, %v2006
      %v2102 = vshrl.u32 %v2006, 16
      %v2103 = vshrl.u32 %v2034, 16
      %v2104 = vpack.i.b16 %v2103, %v2102
      %v2107 = vpack.i.b16 %v2032, %v2004
      %v2108 = vshrl.u32 %v2004, 16
      %v2109 = vshrl.u32 %v2032, 16
      %v2110 = vpack.i.b16 %v2109, %v2108
      %v2113 = vpack.i.b16 %v2036, %v2008
      %v2114 = vshrl.u32 %v2008, 16
      %v2115 = vshrl.u32 %v2036, 16
      %v2116 = vpack.i.b16 %v2115, %v2114
      %v2119 = vpack.i.b16 %v2084, %v2056
      %v2120 = vshrl.u32 %v2056, 16
      %v2121 = vshrl.u32 %v2084, 16
      %v2122 = vpack.i.b16 %v2121, %v2120
      %v2125 = vpack.i.b16 %v2090, %v2062
      %v2126 = vshrl.u32 %v2062, 16
      %v2127 = vshrl.u32 %v2090, 16
      %v2128 = vpack.i.b16 %v2127, %v2126
      %v2131 = vpack.i.b16 %v2088, %v2060
      %v2132 = vshrl.u32 %v2060, 16
      %v2133 = vshrl.u32 %v2088, 16
      %v2134 = vpack.i.b16 %v2133, %v2132
      %v2137 = vpack.i.b16 %v2092, %v2064
      %v2138 = vshrl.u32 %v2064, 16
      %v2139 = vshrl.u32 %v2092, 16
      %v2140 = vpack.i.b16 %v2139, %v2138
      %2141 = vrot.lane.b32.xlu0 %v1696, 120
      %v2142 = vpop.permute.xlu0 %2141
      %2143 = vrot.lane.b32.xlu0 %v1700, 120
      %v2144 = vpop.permute.xlu0 %2143
      %2145 = vrot.lane.b32.xlu0 %v1704, 120
      %v2146 = vpop.permute.xlu0 %2145
      %2147 = vrot.lane.b32.xlu0 %v1708, 120
      %v2148 = vpop.permute.xlu0 %2147
      %2149 = vrot.lane.b32.xlu0 %v1712, 120
      %v2150 = vpop.permute.xlu0 %2149
      %2151 = vrot.lane.b32.xlu0 %v1716, 120
      %v2152 = vpop.permute.xlu0 %2151
      %2153 = vrot.lane.b32.xlu0 %v1720, 120
      %v2154 = vpop.permute.xlu0 %2153
      %2155 = vrot.lane.b32.xlu0 %v1724, 120
      %v2156 = vpop.permute.xlu0 %2155
      %2157 = vrot.lane.b32.xlu0 %v1728, 120
      %v2158 = vpop.permute.xlu0 %2157
      %2159 = vrot.lane.b32.xlu0 %v1732, 120
      %v2160 = vpop.permute.xlu0 %2159
      %2161 = vrot.lane.b32.xlu0 %v1736, 120
      %v2162 = vpop.permute.xlu0 %2161
      %2163 = vrot.lane.b32.xlu0 %v1740, 120
      %v2164 = vpop.permute.xlu0 %2163
      %2165 = vrot.lane.b32.xlu0 %v1744, 120
      %v2166 = vpop.permute.xlu0 %2165
      %2167 = vrot.lane.b32.xlu0 %v1748, 120
      %v2168 = vpop.permute.xlu0 %2167
      %2169 = vrot.lane.b32.xlu0 %v1752, 120
      %v2170 = vpop.permute.xlu0 %2169
      %2171 = vrot.lane.b32.xlu0 %v1756, 120
      %v2172 = vpop.permute.xlu0 %2171
      %v2189 = vrot.slane %v2150, 4
      %v2190 = vsel %vm270, %v2189, %v2142
      %v2192 = vunpack.c.l.s4 1983009808
      %v2193 = vunpack.c.0.s8 %v2192
      %v2194 = vperm.slane %v2190, %v2193
      %v2195 = vrot.slane %v2154, 4
      %v2196 = vsel %vm270, %v2195, %v2146
      %v2198 = vunpack.c.l.s4 1983009808
      %v2199 = vunpack.c.0.s8 %v2198
      %v2200 = vperm.slane %v2196, %v2199
      %v2201 = vrot.slane %v2200, 4
      %v2202 = vsel %vm270, %v2201, %v2194
      %v2203 = vrot.slane %v2194, 4
      %v2204 = vsel %vm270, %v2200, %v2203
      %v2206 = vunpack.c.l.s4 1934713408
      %v2207 = vunpack.c.0.s8 %v2206
      %v2208 = vperm.slane %v2202, %v2207
      %v2210 = vunpack.c.l.s4 1934713408
      %v2211 = vunpack.c.0.s8 %v2210
      %v2212 = vperm.slane %v2204, %v2211
      %v2213 = vrot.slane %v2208, 4
      %v2214 = vsel %vm270, 0, %v2213
      %v2215 = vrot.slane %v2212, 4
      %v2216 = vsel %vm270, 0, %v2215
      %v2217 = vrot.slane %v2152, 4
      %v2218 = vsel %vm270, %v2217, %v2144
      %v2220 = vunpack.c.l.s4 1983009808
      %v2221 = vunpack.c.0.s8 %v2220
      %v2222 = vperm.slane %v2218, %v2221
      %v2223 = vrot.slane %v2156, 4
      %v2224 = vsel %vm270, %v2223, %v2148
      %v2226 = vunpack.c.l.s4 1983009808
      %v2227 = vunpack.c.0.s8 %v2226
      %v2228 = vperm.slane %v2224, %v2227
      %v2229 = vrot.slane %v2228, 4
      %v2230 = vsel %vm270, %v2229, %v2222
      %v2231 = vrot.slane %v2222, 4
      %v2232 = vsel %vm270, %v2228, %v2231
      %v2234 = vunpack.c.l.s4 1934713408
      %v2235 = vunpack.c.0.s8 %v2234
      %v2236 = vperm.slane %v2230, %v2235
      %v2238 = vunpack.c.l.s4 1934713408
      %v2239 = vunpack.c.0.s8 %v2238
      %v2240 = vperm.slane %v2232, %v2239
      %v2241 = vrot.slane %v2236, 4
      %v2242 = vsel %vm270, 0, %v2241
      %v2243 = vrot.slane %v2240, 4
      %v2244 = vsel %vm270, 0, %v2243
      %v2245 = vrot.slane %v2166, 4
      %v2246 = vsel %vm270, %v2245, %v2158
      %v2248 = vunpack.c.l.s4 1983009808
      %v2249 = vunpack.c.0.s8 %v2248
      %v2250 = vperm.slane %v2246, %v2249
      %v2251 = vrot.slane %v2170, 4
      %v2252 = vsel %vm270, %v2251, %v2162
      %v2254 = vunpack.c.l.s4 1983009808
      %v2255 = vunpack.c.0.s8 %v2254
      %v2256 = vperm.slane %v2252, %v2255
      %v2257 = vrot.slane %v2256, 4
      %v2258 = vsel %vm270, %v2257, %v2250
      %v2259 = vrot.slane %v2250, 4
      %v2260 = vsel %vm270, %v2256, %v2259
      %v2262 = vunpack.c.l.s4 1934713408
      %v2263 = vunpack.c.0.s8 %v2262
      %v2264 = vperm.slane %v2258, %v2263
      %v2266 = vunpack.c.l.s4 1934713408
      %v2267 = vunpack.c.0.s8 %v2266
      %v2268 = vperm.slane %v2260, %v2267
      %v2269 = vrot.slane %v2264, 4
      %v2270 = vsel %vm270, 0, %v2269
      %v2271 = vrot.slane %v2268, 4
      %v2272 = vsel %vm270, 0, %v2271
      %v2273 = vrot.slane %v2168, 4
      %v2274 = vsel %vm270, %v2273, %v2160
      %v2276 = vunpack.c.l.s4 1983009808
      %v2277 = vunpack.c.0.s8 %v2276
      %v2278 = vperm.slane %v2274, %v2277
      %v2279 = vrot.slane %v2172, 4
      %v2280 = vsel %vm270, %v2279, %v2164
      %v2282 = vunpack.c.l.s4 1983009808
      %v2283 = vunpack.c.0.s8 %v2282
      %v2284 = vperm.slane %v2280, %v2283
      %v2285 = vrot.slane %v2284, 4
      %v2286 = vsel %vm270, %v2285, %v2278
      %v2287 = vrot.slane %v2278, 4
      %v2288 = vsel %vm270, %v2284, %v2287
      %v2290 = vunpack.c.l.s4 1934713408
      %v2291 = vunpack.c.0.s8 %v2290
      %v2292 = vperm.slane %v2286, %v2291
      %v2294 = vunpack.c.l.s4 1934713408
      %v2295 = vunpack.c.0.s8 %v2294
      %v2296 = vperm.slane %v2288, %v2295
      %v2297 = vrot.slane %v2292, 4
      %v2298 = vsel %vm270, 0, %v2297
      %v2299 = vrot.slane %v2296, 4
      %v2300 = vsel %vm270, 0, %v2299
      %v2303 = vpack.i.b16 %v2236, %v2208
      %v2304 = vshrl.u32 %v2208, 16
      %v2305 = vshrl.u32 %v2236, 16
      %v2306 = vpack.i.b16 %v2305, %v2304
      %v2309 = vpack.i.b16 %v2242, %v2214
      %v2310 = vshrl.u32 %v2214, 16
      %v2311 = vshrl.u32 %v2242, 16
      %v2312 = vpack.i.b16 %v2311, %v2310
      %v2315 = vpack.i.b16 %v2240, %v2212
      %v2316 = vshrl.u32 %v2212, 16
      %v2317 = vshrl.u32 %v2240, 16
      %v2318 = vpack.i.b16 %v2317, %v2316
      %v2321 = vpack.i.b16 %v2244, %v2216
      %v2322 = vshrl.u32 %v2216, 16
      %v2323 = vshrl.u32 %v2244, 16
      %v2324 = vpack.i.b16 %v2323, %v2322
      %v2327 = vpack.i.b16 %v2292, %v2264
      %v2328 = vshrl.u32 %v2264, 16
      %v2329 = vshrl.u32 %v2292, 16
      %v2330 = vpack.i.b16 %v2329, %v2328
      %v2333 = vpack.i.b16 %v2298, %v2270
      %v2334 = vshrl.u32 %v2270, 16
      %v2335 = vshrl.u32 %v2298, 16
      %v2336 = vpack.i.b16 %v2335, %v2334
      %v2339 = vpack.i.b16 %v2296, %v2268
      %v2340 = vshrl.u32 %v2268, 16
      %v2341 = vshrl.u32 %v2296, 16
      %v2342 = vpack.i.b16 %v2341, %v2340
      %v2345 = vpack.i.b16 %v2300, %v2272
      %v2346 = vshrl.u32 %v2272, 16
      %v2347 = vshrl.u32 %v2300, 16
      %v2348 = vpack.i.b16 %v2347, %v2346
      %v2349 = vunpack.c.l.b16 %v384
      %v2350 = vunpack.c.l.b16 %v408
      %v2351 = vunpack.c.l.b16 %v387
      %v2352 = vunpack.c.l.b16 %v411
      %v2353 = vunpack.c.l.b16 %v390
      %v2354 = vunpack.c.l.b16 %v414
      %v2355 = vunpack.c.l.b16 %v393
      %v2356 = vunpack.c.l.b16 %v417
      %v2357 = vunpack.c.l.b16 %v396
      %v2358 = vunpack.c.l.b16 %v420
      %v2359 = vunpack.c.l.b16 %v399
      %v2360 = vunpack.c.l.b16 %v423
      %v2361 = vunpack.c.l.b16 %v402
      %v2362 = vunpack.c.l.b16 %v426
      %v2363 = vunpack.c.l.b16 %v405
      %v2364 = vunpack.c.l.b16 %v429
      %v2365 = vpack.c.b16 %v2350, %v2349
      %v2366 = vpack.c.b16 %v2352, %v2351
      %v2367 = vpack.c.b16 %v2354, %v2353
      %v2368 = vpack.c.b16 %v2356, %v2355
      %v2369 = vpack.c.b16 %v2358, %v2357
      %v2370 = vpack.c.b16 %v2360, %v2359
      %v2371 = vpack.c.b16 %v2362, %v2361
      %v2372 = vpack.c.b16 %v2364, %v2363
      %v2373 = vunpack.c.l.b16 %v589
      %v2374 = vunpack.c.l.b16 %v613
      %v2375 = vunpack.c.l.b16 %v592
      %v2376 = vunpack.c.l.b16 %v616
      %v2377 = vunpack.c.l.b16 %v595
      %v2378 = vunpack.c.l.b16 %v619
      %v2379 = vunpack.c.l.b16 %v598
      %v2380 = vunpack.c.l.b16 %v622
      %v2381 = vunpack.c.l.b16 %v601
      %v2382 = vunpack.c.l.b16 %v625
      %v2383 = vunpack.c.l.b16 %v604
      %v2384 = vunpack.c.l.b16 %v628
      %v2385 = vunpack.c.l.b16 %v607
      %v2386 = vunpack.c.l.b16 %v631
      %v2387 = vunpack.c.l.b16 %v610
      %v2388 = vunpack.c.l.b16 %v634
      %v2389 = vpack.c.b16 %v2374, %v2373
      %v2390 = vpack.c.b16 %v2376, %v2375
      %v2391 = vpack.c.b16 %v2378, %v2377
      %v2392 = vpack.c.b16 %v2380, %v2379
      %v2393 = vpack.c.b16 %v2382, %v2381
      %v2394 = vpack.c.b16 %v2384, %v2383
      %v2395 = vpack.c.b16 %v2386, %v2385
      %v2396 = vpack.c.b16 %v2388, %v2387
      %2397 = vrot.lane.b32.xlu0 %v2389, 4
      %v2398 = vpop.permute.xlu0 %2397
      %2399 = vrot.lane.b32.xlu0 %v2390, 4
      %v2400 = vpop.permute.xlu0 %2399
      %2401 = vrot.lane.b32.xlu0 %v2391, 4
      %v2402 = vpop.permute.xlu0 %2401
      %2403 = vrot.lane.b32.xlu0 %v2392, 4
      %v2404 = vpop.permute.xlu0 %2403
      %2405 = vrot.lane.b32.xlu0 %v2393, 4
      %v2406 = vpop.permute.xlu0 %2405
      %2407 = vrot.lane.b32.xlu0 %v2394, 4
      %v2408 = vpop.permute.xlu0 %2407
      %2409 = vrot.lane.b32.xlu0 %v2395, 4
      %v2410 = vpop.permute.xlu0 %2409
      %2411 = vrot.lane.b32.xlu0 %v2396, 4
      %v2412 = vpop.permute.xlu0 %2411
      %v2413 = vunpack.c.l.b16 %v794
      %v2414 = vunpack.c.l.b16 %v818
      %v2415 = vunpack.c.l.b16 %v797
      %v2416 = vunpack.c.l.b16 %v821
      %v2417 = vunpack.c.l.b16 %v800
      %v2418 = vunpack.c.l.b16 %v824
      %v2419 = vunpack.c.l.b16 %v803
      %v2420 = vunpack.c.l.b16 %v827
      %v2421 = vunpack.c.l.b16 %v806
      %v2422 = vunpack.c.l.b16 %v830
      %v2423 = vunpack.c.l.b16 %v809
      %v2424 = vunpack.c.l.b16 %v833
      %v2425 = vunpack.c.l.b16 %v812
      %v2426 = vunpack.c.l.b16 %v836
      %v2427 = vunpack.c.l.b16 %v815
      %v2428 = vunpack.c.l.b16 %v839
      %v2429 = vpack.c.b16 %v2414, %v2413
      %v2430 = vpack.c.b16 %v2416, %v2415
      %v2431 = vpack.c.b16 %v2418, %v2417
      %v2432 = vpack.c.b16 %v2420, %v2419
      %v2433 = vpack.c.b16 %v2422, %v2421
      %v2434 = vpack.c.b16 %v2424, %v2423
      %v2435 = vpack.c.b16 %v2426, %v2425
      %v2436 = vpack.c.b16 %v2428, %v2427
      %2437 = vrot.lane.b32.xlu0 %v2429, 8
      %v2438 = vpop.permute.xlu0 %2437
      %2439 = vrot.lane.b32.xlu0 %v2430, 8
      %v2440 = vpop.permute.xlu0 %2439
      %2441 = vrot.lane.b32.xlu0 %v2431, 8
      %v2442 = vpop.permute.xlu0 %2441
      %2443 = vrot.lane.b32.xlu0 %v2432, 8
      %v2444 = vpop.permute.xlu0 %2443
      %2445 = vrot.lane.b32.xlu0 %v2433, 8
      %v2446 = vpop.permute.xlu0 %2445
      %2447 = vrot.lane.b32.xlu0 %v2434, 8
      %v2448 = vpop.permute.xlu0 %2447
      %2449 = vrot.lane.b32.xlu0 %v2435, 8
      %v2450 = vpop.permute.xlu0 %2449
      %2451 = vrot.lane.b32.xlu0 %v2436, 8
      %v2452 = vpop.permute.xlu0 %2451
      %v2453 = vunpack.c.l.b16 %v1228
      %v2454 = vunpack.c.l.b16 %v1252
      %v2455 = vunpack.c.l.b16 %v1231
      %v2456 = vunpack.c.l.b16 %v1255
      %v2457 = vunpack.c.l.b16 %v1234
      %v2458 = vunpack.c.l.b16 %v1258
      %v2459 = vunpack.c.l.b16 %v1237
      %v2460 = vunpack.c.l.b16 %v1261
      %v2461 = vunpack.c.l.b16 %v1240
      %v2462 = vunpack.c.l.b16 %v1264
      %v2463 = vunpack.c.l.b16 %v1243
      %v2464 = vunpack.c.l.b16 %v1267
      %v2465 = vunpack.c.l.b16 %v1246
      %v2466 = vunpack.c.l.b16 %v1270
      %v2467 = vunpack.c.l.b16 %v1249
      %v2468 = vunpack.c.l.b16 %v1273
      %v2469 = vpack.c.b16 %v2454, %v2453
      %v2470 = vpack.c.b16 %v2456, %v2455
      %v2471 = vpack.c.b16 %v2458, %v2457
      %v2472 = vpack.c.b16 %v2460, %v2459
      %v2473 = vpack.c.b16 %v2462, %v2461
      %v2474 = vpack.c.b16 %v2464, %v2463
      %v2475 = vpack.c.b16 %v2466, %v2465
      %v2476 = vpack.c.b16 %v2468, %v2467
      %2477 = vrot.lane.b32.xlu0 %v2469, 12
      %v2478 = vpop.permute.xlu0 %2477
      %2479 = vrot.lane.b32.xlu0 %v2470, 12
      %v2480 = vpop.permute.xlu0 %2479
      %2481 = vrot.lane.b32.xlu0 %v2471, 12
      %v2482 = vpop.permute.xlu0 %2481
      %2483 = vrot.lane.b32.xlu0 %v2472, 12
      %v2484 = vpop.permute.xlu0 %2483
      %2485 = vrot.lane.b32.xlu0 %v2473, 12
      %v2486 = vpop.permute.xlu0 %2485
      %2487 = vrot.lane.b32.xlu0 %v2474, 12
      %v2488 = vpop.permute.xlu0 %2487
      %2489 = vrot.lane.b32.xlu0 %v2475, 12
      %v2490 = vpop.permute.xlu0 %2489
      %2491 = vrot.lane.b32.xlu0 %v2476, 12
      %v2492 = vpop.permute.xlu0 %2491
      %v2493 = vunpack.c.l.b16 %v1436
      %v2494 = vunpack.c.l.b16 %v1460
      %v2495 = vunpack.c.l.b16 %v1439
      %v2496 = vunpack.c.l.b16 %v1463
      %v2497 = vunpack.c.l.b16 %v1442
      %v2498 = vunpack.c.l.b16 %v1466
      %v2499 = vunpack.c.l.b16 %v1445
      %v2500 = vunpack.c.l.b16 %v1469
      %v2501 = vunpack.c.l.b16 %v1448
      %v2502 = vunpack.c.l.b16 %v1472
      %v2503 = vunpack.c.l.b16 %v1451
      %v2504 = vunpack.c.l.b16 %v1475
      %v2505 = vunpack.c.l.b16 %v1454
      %v2506 = vunpack.c.l.b16 %v1478
      %v2507 = vunpack.c.l.b16 %v1457
      %v2508 = vunpack.c.l.b16 %v1481
      %v2509 = vpack.c.b16 %v2494, %v2493
      %v2510 = vpack.c.b16 %v2496, %v2495
      %v2511 = vpack.c.b16 %v2498, %v2497
      %v2512 = vpack.c.b16 %v2500, %v2499
      %v2513 = vpack.c.b16 %v2502, %v2501
      %v2514 = vpack.c.b16 %v2504, %v2503
      %v2515 = vpack.c.b16 %v2506, %v2505
      %v2516 = vpack.c.b16 %v2508, %v2507
      %2517 = vrot.lane.b32.xlu0 %v2509, 16
      %v2518 = vpop.permute.xlu0 %2517
      %2519 = vrot.lane.b32.xlu0 %v2510, 16
      %v2520 = vpop.permute.xlu0 %2519
      %2521 = vrot.lane.b32.xlu0 %v2511, 16
      %v2522 = vpop.permute.xlu0 %2521
      %2523 = vrot.lane.b32.xlu0 %v2512, 16
      %v2524 = vpop.permute.xlu0 %2523
      %2525 = vrot.lane.b32.xlu0 %v2513, 16
      %v2526 = vpop.permute.xlu0 %2525
      %2527 = vrot.lane.b32.xlu0 %v2514, 16
      %v2528 = vpop.permute.xlu0 %2527
      %2529 = vrot.lane.b32.xlu0 %v2515, 16
      %v2530 = vpop.permute.xlu0 %2529
      %2531 = vrot.lane.b32.xlu0 %v2516, 16
      %v2532 = vpop.permute.xlu0 %2531
      %v2533 = vunpack.c.l.b16 %v1644
      %v2534 = vunpack.c.l.b16 %v1668
      %v2535 = vunpack.c.l.b16 %v1647
      %v2536 = vunpack.c.l.b16 %v1671
      %v2537 = vunpack.c.l.b16 %v1650
      %v2538 = vunpack.c.l.b16 %v1674
      %v2539 = vunpack.c.l.b16 %v1653
      %v2540 = vunpack.c.l.b16 %v1677
      %v2541 = vunpack.c.l.b16 %v1656
      %v2542 = vunpack.c.l.b16 %v1680
      %v2543 = vunpack.c.l.b16 %v1659
      %v2544 = vunpack.c.l.b16 %v1683
      %v2545 = vunpack.c.l.b16 %v1662
      %v2546 = vunpack.c.l.b16 %v1686
      %v2547 = vunpack.c.l.b16 %v1665
      %v2548 = vunpack.c.l.b16 %v1689
      %v2549 = vpack.c.b16 %v2534, %v2533
      %v2550 = vpack.c.b16 %v2536, %v2535
      %v2551 = vpack.c.b16 %v2538, %v2537
      %v2552 = vpack.c.b16 %v2540, %v2539
      %v2553 = vpack.c.b16 %v2542, %v2541
      %v2554 = vpack.c.b16 %v2544, %v2543
      %v2555 = vpack.c.b16 %v2546, %v2545
      %v2556 = vpack.c.b16 %v2548, %v2547
      %2557 = vrot.lane.b32.xlu0 %v2549, 20
      %v2558 = vpop.permute.xlu0 %2557
      %2559 = vrot.lane.b32.xlu0 %v2550, 20
      %v2560 = vpop.permute.xlu0 %2559
      %2561 = vrot.lane.b32.xlu0 %v2551, 20
      %v2562 = vpop.permute.xlu0 %2561
      %2563 = vrot.lane.b32.xlu0 %v2552, 20
      %v2564 = vpop.permute.xlu0 %2563
      %2565 = vrot.lane.b32.xlu0 %v2553, 20
      %v2566 = vpop.permute.xlu0 %2565
      %2567 = vrot.lane.b32.xlu0 %v2554, 20
      %v2568 = vpop.permute.xlu0 %2567
      %2569 = vrot.lane.b32.xlu0 %v2555, 20
      %v2570 = vpop.permute.xlu0 %2569
      %2571 = vrot.lane.b32.xlu0 %v2556, 20
      %v2572 = vpop.permute.xlu0 %2571
      %v2573 = vunpack.c.l.b16 %v1887
      %v2574 = vunpack.c.l.b16 %v1911
      %v2575 = vunpack.c.l.b16 %v1890
      %v2576 = vunpack.c.l.b16 %v1914
      %v2577 = vunpack.c.l.b16 %v1893
      %v2578 = vunpack.c.l.b16 %v1917
      %v2579 = vunpack.c.l.b16 %v1896
      %v2580 = vunpack.c.l.b16 %v1920
      %v2581 = vunpack.c.l.b16 %v1899
      %v2582 = vunpack.c.l.b16 %v1923
      %v2583 = vunpack.c.l.b16 %v1902
      %v2584 = vunpack.c.l.b16 %v1926
      %v2585 = vunpack.c.l.b16 %v1905
      %v2586 = vunpack.c.l.b16 %v1929
      %v2587 = vunpack.c.l.b16 %v1908
      %v2588 = vunpack.c.l.b16 %v1932
      %v2589 = vpack.c.b16 %v2574, %v2573
      %v2590 = vpack.c.b16 %v2576, %v2575
      %v2591 = vpack.c.b16 %v2578, %v2577
      %v2592 = vpack.c.b16 %v2580, %v2579
      %v2593 = vpack.c.b16 %v2582, %v2581
      %v2594 = vpack.c.b16 %v2584, %v2583
      %v2595 = vpack.c.b16 %v2586, %v2585
      %v2596 = vpack.c.b16 %v2588, %v2587
      %2597 = vrot.lane.b32.xlu0 %v2589, 24
      %v2598 = vpop.permute.xlu0 %2597
      %2599 = vrot.lane.b32.xlu0 %v2590, 24
      %v2600 = vpop.permute.xlu0 %2599
      %2601 = vrot.lane.b32.xlu0 %v2591, 24
      %v2602 = vpop.permute.xlu0 %2601
      %2603 = vrot.lane.b32.xlu0 %v2592, 24
      %v2604 = vpop.permute.xlu0 %2603
      %2605 = vrot.lane.b32.xlu0 %v2593, 24
      %v2606 = vpop.permute.xlu0 %2605
      %2607 = vrot.lane.b32.xlu0 %v2594, 24
      %v2608 = vpop.permute.xlu0 %2607
      %2609 = vrot.lane.b32.xlu0 %v2595, 24
      %v2610 = vpop.permute.xlu0 %2609
      %2611 = vrot.lane.b32.xlu0 %v2596, 24
      %v2612 = vpop.permute.xlu0 %2611
      %v2613 = vunpack.c.l.b16 %v2095
      %v2614 = vunpack.c.l.b16 %v2119
      %v2615 = vunpack.c.l.b16 %v2098
      %v2616 = vunpack.c.l.b16 %v2122
      %v2617 = vunpack.c.l.b16 %v2101
      %v2618 = vunpack.c.l.b16 %v2125
      %v2619 = vunpack.c.l.b16 %v2104
      %v2620 = vunpack.c.l.b16 %v2128
      %v2621 = vunpack.c.l.b16 %v2107
      %v2622 = vunpack.c.l.b16 %v2131
      %v2623 = vunpack.c.l.b16 %v2110
      %v2624 = vunpack.c.l.b16 %v2134
      %v2625 = vunpack.c.l.b16 %v2113
      %v2626 = vunpack.c.l.b16 %v2137
      %v2627 = vunpack.c.l.b16 %v2116
      %v2628 = vunpack.c.l.b16 %v2140
      %v2629 = vpack.c.b16 %v2614, %v2613
      %v2630 = vpack.c.b16 %v2616, %v2615
      %v2631 = vpack.c.b16 %v2618, %v2617
      %v2632 = vpack.c.b16 %v2620, %v2619
      %v2633 = vpack.c.b16 %v2622, %v2621
      %v2634 = vpack.c.b16 %v2624, %v2623
      %v2635 = vpack.c.b16 %v2626, %v2625
      %v2636 = vpack.c.b16 %v2628, %v2627
      %2637 = vrot.lane.b32.xlu0 %v2629, 28
      %v2638 = vpop.permute.xlu0 %2637
      %2639 = vrot.lane.b32.xlu0 %v2630, 28
      %v2640 = vpop.permute.xlu0 %2639
      %2641 = vrot.lane.b32.xlu0 %v2631, 28
      %v2642 = vpop.permute.xlu0 %2641
      %2643 = vrot.lane.b32.xlu0 %v2632, 28
      %v2644 = vpop.permute.xlu0 %2643
      %2645 = vrot.lane.b32.xlu0 %v2633, 28
      %v2646 = vpop.permute.xlu0 %2645
      %2647 = vrot.lane.b32.xlu0 %v2634, 28
      %v2648 = vpop.permute.xlu0 %2647
      %2649 = vrot.lane.b32.xlu0 %v2635, 28
      %v2650 = vpop.permute.xlu0 %2649
      %2651 = vrot.lane.b32.xlu0 %v2636, 28
      %v2652 = vpop.permute.xlu0 %2651
      %v2653 = vunpack.c.l.b16 %v2303
      %v2654 = vunpack.c.l.b16 %v2327
      %v2655 = vunpack.c.l.b16 %v2306
      %v2656 = vunpack.c.l.b16 %v2330
      %v2657 = vunpack.c.l.b16 %v2309
      %v2658 = vunpack.c.l.b16 %v2333
      %v2659 = vunpack.c.l.b16 %v2312
      %v2660 = vunpack.c.l.b16 %v2336
      %v2661 = vunpack.c.l.b16 %v2315
      %v2662 = vunpack.c.l.b16 %v2339
      %v2663 = vunpack.c.l.b16 %v2318
      %v2664 = vunpack.c.l.b16 %v2342
      %v2665 = vunpack.c.l.b16 %v2321
      %v2666 = vunpack.c.l.b16 %v2345
      %v2667 = vunpack.c.l.b16 %v2324
      %v2668 = vunpack.c.l.b16 %v2348
      %v2669 = vpack.c.b16 %v2654, %v2653
      %v2670 = vpack.c.b16 %v2656, %v2655
      %v2671 = vpack.c.b16 %v2658, %v2657
      %v2672 = vpack.c.b16 %v2660, %v2659
      %v2673 = vpack.c.b16 %v2662, %v2661
      %v2674 = vpack.c.b16 %v2664, %v2663
      %v2675 = vpack.c.b16 %v2666, %v2665
      %v2676 = vpack.c.b16 %v2668, %v2667
      %2677 = vrot.lane.b32.xlu0 %v2669, 32
      %v2678 = vpop.permute.xlu0 %2677
      %2679 = vrot.lane.b32.xlu0 %v2670, 32
      %v2680 = vpop.permute.xlu0 %2679
      %2681 = vrot.lane.b32.xlu0 %v2671, 32
      %v2682 = vpop.permute.xlu0 %2681
      %2683 = vrot.lane.b32.xlu0 %v2672, 32
      %v2684 = vpop.permute.xlu0 %2683
      %2685 = vrot.lane.b32.xlu0 %v2673, 32
      %v2686 = vpop.permute.xlu0 %2685
      %2687 = vrot.lane.b32.xlu0 %v2674, 32
      %v2688 = vpop.permute.xlu0 %2687
      %2689 = vrot.lane.b32.xlu0 %v2675, 32
      %v2690 = vpop.permute.xlu0 %2689
      %2691 = vrot.lane.b32.xlu0 %v2676, 32
      %v2692 = vpop.permute.xlu0 %2691
      %vm2693 = vcmask 31744
      %v2696 = vsel %vm2693, %v2365, %v2398
      %v2699 = vsel %vm2693, %v2366, %v2400
      %v2702 = vsel %vm2693, %v2367, %v2402
      %v2705 = vsel %vm2693, %v2368, %v2404
      %v2708 = vsel %vm2693, %v2369, %v2406
      %v2711 = vsel %vm2693, %v2370, %v2408
      %v2714 = vsel %vm2693, %v2371, %v2410
      %v2717 = vsel %vm2693, %v2372, %v2412
      %vm2718 = vcmask 64512
      %v2720 = vsel %vm2718, %v2696, %v2438
      %v2722 = vsel %vm2718, %v2699, %v2440
      %v2724 = vsel %vm2718, %v2702, %v2442
      %v2726 = vsel %vm2718, %v2705, %v2444
      %v2728 = vsel %vm2718, %v2708, %v2446
      %v2730 = vsel %vm2718, %v2711, %v2448
      %v2732 = vsel %vm2718, %v2714, %v2450
      %v2734 = vsel %vm2718, %v2717, %v2452
      %vm2735 = vcmask 97280
      %v2737 = vsel %vm2735, %v2720, %v2478
      %v2739 = vsel %vm2735, %v2722, %v2480
      %v2741 = vsel %vm2735, %v2724, %v2482
      %v2743 = vsel %vm2735, %v2726, %v2484
      %v2745 = vsel %vm2735, %v2728, %v2486
      %v2747 = vsel %vm2735, %v2730, %v2488
      %v2749 = vsel %vm2735, %v2732, %v2490
      %v2751 = vsel %vm2735, %v2734, %v2492
      %vm2752 = vcmask 130048
      %v2754 = vsel %vm2752, %v2737, %v2518
      %v2756 = vsel %vm2752, %v2739, %v2520
      %v2758 = vsel %vm2752, %v2741, %v2522
      %v2760 = vsel %vm2752, %v2743, %v2524
      %v2762 = vsel %vm2752, %v2745, %v2526
      %v2764 = vsel %vm2752, %v2747, %v2528
      %v2766 = vsel %vm2752, %v2749, %v2530
      %v2768 = vsel %vm2752, %v2751, %v2532
      %vm2769 = vcmask 162816
      %v2771 = vsel %vm2769, %v2754, %v2558
      %v2773 = vsel %vm2769, %v2756, %v2560
      %v2775 = vsel %vm2769, %v2758, %v2562
      %v2777 = vsel %vm2769, %v2760, %v2564
      %v2779 = vsel %vm2769, %v2762, %v2566
      %v2781 = vsel %vm2769, %v2764, %v2568
      %v2783 = vsel %vm2769, %v2766, %v2570
      %v2785 = vsel %vm2769, %v2768, %v2572
      %vm2786 = vcmask 195584
      %v2788 = vsel %vm2786, %v2771, %v2598
      %v2790 = vsel %vm2786, %v2773, %v2600
      %v2792 = vsel %vm2786, %v2775, %v2602
      %v2794 = vsel %vm2786, %v2777, %v2604
      %v2796 = vsel %vm2786, %v2779, %v2606
      %v2798 = vsel %vm2786, %v2781, %v2608
      %v2800 = vsel %vm2786, %v2783, %v2610
      %v2802 = vsel %vm2786, %v2785, %v2612
      %vm2803 = vcmask 228352
      %v2805 = vsel %vm2803, %v2788, %v2638
      %v2807 = vsel %vm2803, %v2790, %v2640
      %v2809 = vsel %vm2803, %v2792, %v2642
      %v2811 = vsel %vm2803, %v2794, %v2644
      %v2813 = vsel %vm2803, %v2796, %v2646
      %v2815 = vsel %vm2803, %v2798, %v2648
      %v2817 = vsel %vm2803, %v2800, %v2650
      %v2819 = vsel %vm2803, %v2802, %v2652
      %vm2820 = vcmask 261120
      %v2822 = vsel %vm2820, %v2805, %v2678
      %v2824 = vsel %vm2820, %v2807, %v2680
      %v2826 = vsel %vm2820, %v2809, %v2682
      %v2828 = vsel %vm2820, %v2811, %v2684
      %v2830 = vsel %vm2820, %v2813, %v2686
      %v2832 = vsel %vm2820, %v2815, %v2688
      %v2834 = vsel %vm2820, %v2817, %v2690
      %v2836 = vsel %vm2820, %v2819, %v2692
      %v2837 = vld [vmem:[%s1] sm:$0xf]
      %v2838 = vld [vmem:[%s1 + $0x4] sm:$0xf]
      %v2839 = vld [vmem:[%s1 + $0x8] sm:$0xf]
      %v2840 = vld [vmem:[%s1 + $0xc] sm:$0xf]
      %v2841 = vld [vmem:[%s1 + $0x10] sm:$0x3]
      %v2847 = vunpack.c.l.b16 %v2837
      %v2848 = vunpack.c.l.b16 %v2838
      %v2849 = vunpack.c.l.b16 %v2839
      %v2850 = vunpack.c.l.b16 %v2840
      %v2851 = vunpack.c.l.b16 %v2841
      %v2852 = vpack.c.b16 %v2848, %v2847
      %v2853 = vpack.c.b16 %v2850, %v2849
      %v2854 = vpack.c.b16 %v2851, %v2851
      %vm2857 = vcmask 293888
      %v2858 = vsel %vm2857, %v2822, 0
      %v2860 = vsel %vm2857, %v2824, 0
      %v2862 = vsel %vm2857, %v2826, 0
      %v2864 = vsel %vm2857, %v2828, 0
      %v2866 = vsel %vm2857, %v2830, 0
      %v2868 = vsel %vm2857, %v2832, 0
      %v2870 = vsel %vm2857, %v2834, 0
      %v2872 = vsel %vm2857, %v2836, 0
      %vm2874 = vcmask 1041408
      %v2876 = vsel %vm2874, %v2854, 0
      %2878 = vmatpush.bf16.msra.mxu0 0
      %2879 = vmatpush.bf16.msra.mxu0 0
      %2880 = vmatpush.bf16.msra.mxu0 0
      %2881 = vmatpush.bf16.msra.mxu0 0
      %2882 = vmatpush.bf16.msra.mxu0 0
      %2883 = vmatpush.bf16.msra.mxu0 %v2876
      %2884 = vmatpush.bf16.msra.mxu0 %v2853
      %2885 = vmatpush.bf16.msra.mxu0 %v2852
      %2886 = vmatmul.bf16.gmra.mxu0 %v2858
      %v2887 = vpop.f32.mrf.mxu0
      %v2888 = vadd.f32 0.0, %v2887
      %v2889 = vpop.f32.mrf.mxu0
      %v2890 = vadd.f32 0.0, %v2889
      %2891 = vmatmul.bf16.gmra.mxu0 %v2860
      %v2892 = vpop.f32.mrf.mxu0
      %v2893 = vadd.f32 0.0, %v2892
      %v2894 = vpop.f32.mrf.mxu0
      %v2895 = vadd.f32 0.0, %v2894
      %2896 = vmatmul.bf16.gmra.mxu0 %v2862
      %v2897 = vpop.f32.mrf.mxu0
      %v2898 = vadd.f32 0.0, %v2897
      %v2899 = vpop.f32.mrf.mxu0
      %v2900 = vadd.f32 0.0, %v2899
      %2901 = vmatmul.bf16.gmra.mxu0 %v2864
      %v2902 = vpop.f32.mrf.mxu0
      %v2903 = vadd.f32 0.0, %v2902
      %v2904 = vpop.f32.mrf.mxu0
      %v2905 = vadd.f32 0.0, %v2904
      %2906 = vmatmul.bf16.gmra.mxu0 %v2866
      %v2907 = vpop.f32.mrf.mxu0
      %v2908 = vadd.f32 0.0, %v2907
      %v2909 = vpop.f32.mrf.mxu0
      %v2910 = vadd.f32 0.0, %v2909
      %2911 = vmatmul.bf16.gmra.mxu0 %v2868
      %v2912 = vpop.f32.mrf.mxu0
      %v2913 = vadd.f32 0.0, %v2912
      %v2914 = vpop.f32.mrf.mxu0
      %v2915 = vadd.f32 0.0, %v2914
      %2916 = vmatmul.bf16.gmra.mxu0 %v2870
      %v2917 = vpop.f32.mrf.mxu0
      %v2918 = vadd.f32 0.0, %v2917
      %v2919 = vpop.f32.mrf.mxu0
      %v2920 = vadd.f32 0.0, %v2919
      %2921 = vmatmul.bf16.gmra.mxu0 %v2872
      %v2922 = vpop.f32.mrf.mxu0
      %v2923 = vadd.f32 0.0, %v2922
      %v2924 = vpop.f32.mrf.mxu0
      %v2925 = vadd.f32 0.0, %v2924
      %2926 = vdwg.mxu0
      %v2927 = vpack.c.bf16 %v2888, %v2888
      %v2928 = vpack.c.bf16 %v2890, %v2890
      %v2929 = vpack.c.bf16 %v2893, %v2893
      %v2930 = vpack.c.bf16 %v2895, %v2895
      %v2931 = vpack.c.bf16 %v2898, %v2898
      %v2932 = vpack.c.bf16 %v2900, %v2900
      %v2933 = vpack.c.bf16 %v2903, %v2903
      %v2934 = vpack.c.bf16 %v2905, %v2905
      %v2935 = vpack.c.bf16 %v2908, %v2908
      %v2936 = vpack.c.bf16 %v2910, %v2910
      %v2937 = vpack.c.bf16 %v2913, %v2913
      %v2938 = vpack.c.bf16 %v2915, %v2915
      %v2939 = vpack.c.bf16 %v2918, %v2918
      %v2940 = vpack.c.bf16 %v2920, %v2920
      %v2941 = vpack.c.bf16 %v2923, %v2923
      %v2942 = vpack.c.bf16 %v2925, %v2925
      %2943 = vst [vmem:[%s205] sm:$0xf] %v2927
      %2944 = vst [vmem:[%s205 + $0x4] sm:$0xf] %v2928
      %2945 = vst [vmem:[%s205 + $0x8] sm:$0xf] %v2929
      %2946 = vst [vmem:[%s205 + $0xc] sm:$0xf] %v2930
      %2947 = vst [vmem:[%s205 + $0x10] sm:$0xf] %v2931
      %2948 = vst [vmem:[%s205 + $0x14] sm:$0xf] %v2932
      %2949 = vst [vmem:[%s205 + $0x18] sm:$0xf] %v2933
      %2950 = vst [vmem:[%s205 + $0x1c] sm:$0xf] %v2934
      %2951 = vst [vmem:[%s205 + $0x20] sm:$0xf] %v2935
      %2952 = vst [vmem:[%s205 + $0x24] sm:$0xf] %v2936
      %2953 = vst [vmem:[%s205 + $0x28] sm:$0xf] %v2937
      %2954 = vst [vmem:[%s205 + $0x2c] sm:$0xf] %v2938
      %2955 = vst [vmem:[%s205 + $0x30] sm:$0xf] %v2939
      %2956 = vst [vmem:[%s205 + $0x34] sm:$0xf] %v2940
      %2957 = vst [vmem:[%s205 + $0x38] sm:$0xf] %v2941
      %2958 = vst [vmem:[%s205 + $0x3c] sm:$0xf] %v2942
      %v2959 = vadd.f32 %v2888, %v2890
      %v2960 = vadd.f32 %v2959, %v2893
      %v2961 = vadd.f32 %v2960, %v2895
      %v2962 = vadd.f32 %v2961, %v2898
      %v2963 = vadd.f32 %v2962, %v2900
      %v2964 = vadd.f32 %v2963, %v2903
      %v2965 = vadd.f32 %v2964, %v2905
      %v2966 = vadd.f32 %v2965, %v2908
      %v2967 = vadd.f32 %v2966, %v2910
      %v2968 = vadd.f32 %v2967, %v2913
      %v2969 = vadd.f32 %v2968, %v2915
      %v2970 = vadd.f32 %v2969, %v2918
      %v2971 = vadd.f32 %v2970, %v2920
      %v2972 = vadd.f32 %v2971, %v2923
      %v2973 = vadd.f32 %v2972, %v2925
      %v2974 = vrot.slane %v2973, 4
      %v2975 = vadd.f32 %v2973, %v2974
      %v2976 = vrot.slane %v2975, 2
      %v2977 = vadd.f32 %v2975, %v2976
      %v2978 = vrot.slane %v2977, 1
      %v2979 = vadd.f32 %v2977, %v2978
      %v2980 = vmul.f32 %v2979, 0.0078125
      %v2981 = vsub.f32 %v2888, %v2980
      %v2982 = vsub.f32 %v2890, %v2980
      %v2983 = vsub.f32 %v2893, %v2980
      %v2984 = vsub.f32 %v2895, %v2980
      %v2985 = vsub.f32 %v2898, %v2980
      %v2986 = vsub.f32 %v2900, %v2980
      %v2987 = vsub.f32 %v2903, %v2980
      %v2988 = vsub.f32 %v2905, %v2980
      %v2989 = vsub.f32 %v2908, %v2980
      %v2990 = vsub.f32 %v2910, %v2980
      %v2991 = vsub.f32 %v2913, %v2980
      %v2992 = vsub.f32 %v2915, %v2980
      %v2993 = vsub.f32 %v2918, %v2980
      %v2994 = vsub.f32 %v2920, %v2980
      %v2995 = vsub.f32 %v2923, %v2980
      %v2996 = vsub.f32 %v2925, %v2980
      %v2997 = vmul.f32 %v2981, %v2981
      %v2998 = vmul.f32 %v2982, %v2982
      %v2999 = vmul.f32 %v2983, %v2983
      %v3000 = vmul.f32 %v2984, %v2984
      %v3001 = vmul.f32 %v2985, %v2985
      %v3002 = vmul.f32 %v2986, %v2986
      %v3003 = vmul.f32 %v2987, %v2987
      %v3004 = vmul.f32 %v2988, %v2988
      %v3005 = vmul.f32 %v2989, %v2989
      %v3006 = vmul.f32 %v2990, %v2990
      %v3007 = vmul.f32 %v2991, %v2991
      %v3008 = vmul.f32 %v2992, %v2992
      %v3009 = vmul.f32 %v2993, %v2993
      %v3010 = vmul.f32 %v2994, %v2994
      %v3011 = vmul.f32 %v2995, %v2995
      %v3012 = vmul.f32 %v2996, %v2996
      %v3013 = vadd.f32 %v2997, %v2998
      %v3014 = vadd.f32 %v3013, %v2999
      %v3015 = vadd.f32 %v3014, %v3000
      %v3016 = vadd.f32 %v3015, %v3001
      %v3017 = vadd.f32 %v3016, %v3002
      %v3018 = vadd.f32 %v3017, %v3003
      %v3019 = vadd.f32 %v3018, %v3004
      %v3020 = vadd.f32 %v3019, %v3005
      %v3021 = vadd.f32 %v3020, %v3006
      %v3022 = vadd.f32 %v3021, %v3007
      %v3023 = vadd.f32 %v3022, %v3008
      %v3024 = vadd.f32 %v3023, %v3009
      %v3025 = vadd.f32 %v3024, %v3010
      %v3026 = vadd.f32 %v3025, %v3011
      %v3027 = vadd.f32 %v3026, %v3012
      %v3028 = vrot.slane %v3027, 4
      %v3029 = vadd.f32 %v3027, %v3028
      %v3030 = vrot.slane %v3029, 2
      %v3031 = vadd.f32 %v3029, %v3030
      %v3032 = vrot.slane %v3031, 1
      %v3033 = vadd.f32 %v3031, %v3032
      %vm3034 = vcmask 1040384
      %v3035 = vsel %vm3034, %v2979, %v3033
      %3036 = vst [vmem:[%s214] sm:$0x3] %v3035
      %s3037 = smul.u32 16, %s20
      %p3038 = scmp.lt.s32.totalorder %s19, 1
      %s3039 = scalar_select %p3038, %s19, 1
      %p3040 = scmp.lt.s32.totalorder %s3037, 31
      %s3041 = scalar_select %p3040, %s3037, 31
      %s3042 = smul.addr %s3039, 32
      %s3043 = sadd.s32 %s3041, %s3042
      %s3044 = smul.addr %s3043, 4
      %s3045 = scalar_lea.vmem %s2, %s3044
      %p3046 = scmp.lt.s32.totalorder %s19, 1
      %s3047 = scalar_select %p3046, %s19, 1
      %p3048 = scmp.lt.s32.totalorder %s20, 1
      %s3049 = scalar_select %p3048, %s20, 1
      %s3050 = smul.addr %s3047, 2
      %s3051 = sadd.s32 %s3049, %s3050
      %s3052 = smul.addr %s3051, 2
      %s3053 = scalar_lea.vmem %s3, %s3052
      // Predicated region
      $region29: #{basic_conv2d.2} parent=27 // pred_check
        %p3054 = pneg %p94
      $region30: #{basic_conv2d.2} parent=27 // pred_check_branch
        %3056 = sbr.rel (%p3054) target = $region32
      $region31: #{basic_conv2d.2} parent=27 // pred_region
        %s3057 = smul.u32 16, %s20
      $region32: #{basic_conv2d.2} parent=27 // pred_fallthru
        _
      // Predicated region
      $region33: #{basic_conv2d.2} parent=27 // pred_check
        %p3058 = pneg %p122
      $region34: #{basic_conv2d.2} parent=27 // pred_check_branch
        %3060 = sbr.rel (%p3058) target = $region36
      $region35: #{basic_conv2d.2} parent=27 // pred_region
        _
      $region36: #{basic_conv2d.2} parent=27 // pred_fallthru
        _
    $region28: #{basic_conv2d.2} parent=5 // pred_fallthru
      _
    %p3061 = scmp.le.s32.totalorder 2, %s10
    // Predicated region
    $region37: #{basic_conv2d.2} parent=5 // pred_check
      %p3062 = pneg %p3061
    $region38: #{basic_conv2d.2} parent=5 // pred_check_branch
      %3064 = sbr.rel (%p3062) target = $region40
    $region39: #{basic_conv2d.2} parent=5 // pred_region
      %s3065 = ssub.s32 %s10, 2
      // Predicated region
      $region41: #{basic_conv2d.2} parent=39 // pred_check
        %p3066 = pneg %p100
      $region42: #{basic_conv2d.2} parent=39 // pred_check_branch
        %3068 = sbr.rel (%p3066) target = $region44
      $region43: #{basic_conv2d.2} parent=39 // pred_region
        %s3069 = smul.u32 16, %s22
        %p3070 = scmp.lt.s32.totalorder %s21, 1
        %s3071 = scalar_select %p3070, %s21, 1
        %p3072 = scmp.lt.s32.totalorder %s3069, 31
        %s3073 = scalar_select %p3072, %s3069, 31
        %s3074 = smul.addr %s3071, 32
        %s3075 = sadd.s32 %s3073, %s3074
        %s3076 = smul.addr %s3075, 4
        %s3077 = scalar_lea.vmem %s2, %s3076
      $region44: #{basic_conv2d.2} parent=39 // pred_fallthru
        _
      // Predicated region
      $region45: #{basic_conv2d.2} parent=39 // pred_check
        %p3078 = pneg %p128
      $region46: #{basic_conv2d.2} parent=39 // pred_check_branch
        %3080 = sbr.rel (%p3078) target = $region48
      $region47: #{basic_conv2d.2} parent=39 // pred_region
        %p3081 = scmp.lt.s32.totalorder %s21, 1
        %s3082 = scalar_select %p3081, %s21, 1
        %p3083 = scmp.lt.s32.totalorder %s22, 1
        %s3084 = scalar_select %p3083, %s22, 1
        %s3085 = smul.addr %s3082, 2
        %s3086 = sadd.s32 %s3084, %s3085
        %s3087 = smul.addr %s3086, 2
        %s3088 = scalar_lea.vmem %s3, %s3087
      $region48: #{basic_conv2d.2} parent=39 // pred_fallthru
        _
    $region40: #{basic_conv2d.2} parent=5 // pred_fallthru
      _
  $region6: #{basic_conv2d.2} parent=0 // loop_footer
    %s14 = sadd.s32 1, %s10
  $region7: #{basic_conv2d.2} parent=0 // loop_footer_branch
    %9 = sbr.rel target = $region3
  $region8: #{basic_conv2d.2} parent=0 // loop_exit
    _

</llo_original>
